<compile_context>
chip_gen: v7x
topology: tpu7x:2x2x1
jax: 0.10.0
libtpu: 0.0.40
codegen_flags: <defaults>
</compile_context>

<pallas_src>
import functools

import jax
import jax.numpy as jnp
import numpy as np
from jax.experimental import pallas as pl
from jax.experimental.pallas import tpu as pltpu


def _round_up(x, m):
    return (x + m - 1) // m * m


def _grid_reduction_kernel(x_ref, wa_ref, wb_ref, b_ref, out_ref, *,
                           hout, wout_pad, cin_pad, cout_pad):
    """One image per grid step.

    x_ref:   (hout+1, 2, wp, 2*cin_pad) bf16, wp = wout_pad + 1
             x_ref[i, s, j, :cin_pad] = img[2*i + s, 2*j,     :]   (even col)
             x_ref[i, s, j, cin_pad:] = img[2*i + s, 2*j + 1, :]   (odd  col)
    wa_ref:  (3, 2*cin_pad, cout_pad) bf16  rows [:cin]=w[kh,0], [cin_pad:]=w[kh,1]
    wb_ref:  (3, cin_pad, cout_pad)   bf16  w[kh, 2]
    b_ref:   (1, cout_pad)            f32
    out_ref: (hout*wout_pad, cout_pad + cin_pad) f32
             [:, :cout_pad] = conv branch, [:, cout_pad:] = maxpool branch
    """
    m = hout * wout_pad
    xv = x_ref[...]                                     # (hout+1, 2, wp, 2*cin_pad)

    acc = jnp.zeros((m, cout_pad), jnp.float32)
    pool = None
    for kh in range(3):                                 # static unroll (3 taps)
        r0, sub = divmod(kh, 2)                         # input row = 2*oh + kh
        band = xv[r0:r0 + hout, sub]                    # (hout, wp, 2*cin_pad)

        # kw=0,1 taps: column pair j == ow  -> lane-aligned, contiguous rows.
        a = band[:, :wout_pad, :].reshape(m, 2 * cin_pad)
        # kw=2 tap: even column of pair j == ow+1 (first half of the lanes).
        xb = band[:, 1:1 + wout_pad, :cin_pad].reshape(m, cin_pad)

        # branch1: two MXU dots per kh, f32 accumulation.
        acc = acc + jnp.dot(a, wa_ref[kh], preferred_element_type=jnp.float32)
        acc = acc + jnp.dot(xb, wb_ref[kh], preferred_element_type=jnp.float32)

        # branch2: 3x3 / stride-2 maxpool over the same taps (f32 max).
        t0 = a[:, :cin_pad].astype(jnp.float32)
        t1 = a[:, cin_pad:].astype(jnp.float32)
        t2 = xb.astype(jnp.float32)
        t = jnp.maximum(jnp.maximum(t0, t1), t2)
        pool = t if pool is None else jnp.maximum(pool, t)

    out_ref[:, :cout_pad] = acc + b_ref[...]            # conv (+ bias)
    out_ref[:, cout_pad:] = pool                         # maxpool


def grid_reduction(x_nchw, weight_oihw, bias):
    """Pallas implementation of GridReduction.forward.

    x_nchw:       (N, Cin, H, W)      float32
    weight_oihw:  (Cout, Cin, 3, 3)   float32   (PyTorch Conv2d layout)
    bias:         (Cout,)             float32
    returns:      (N, Cout + Cin, Hout, Wout)  NCHW (torch.cat dim=1)
    """
    N, Cin, H, W = x_nchw.shape
    Cout = weight_oihw.shape[0]
    Hout = (H - 3) // 2 + 1
    Wout = (W - 3) // 2 + 1

    LANE, SUB = 128, 8
    cin_pad = _round_up(Cin, LANE)
    cout_pad = _round_up(Cout, LANE)
    wout_pad = _round_up(Wout, SUB)          # sublane-aligned columns per row
    wp = wout_pad + 1                        # +1 column pair for the kw=2 tap
    h_pad = 2 * (Hout + 1)                   # even, >= 2*Hout + 1 input rows
    w_pad = 2 * wp
    m = Hout * wout_pad                      # matmul rows per image (mult of 8)
    ctot = cout_pad + cin_pad

    # ---- input glue: ONE fused transpose+cast+pad pass, then free reshapes --
    x = jnp.transpose(x_nchw, (0, 2, 3, 1)).astype(jnp.bfloat16)       # NHWC bf16
    x = jnp.pad(x, ((0, 0), (0, h_pad - H), (0, w_pad - W), (0, cin_pad - Cin)))
    # pack (pair-row, parity) and (even,odd)-column pairs; both reshapes are
    # contiguous in row-major order => no data movement.
    xg = x.reshape(N * (Hout + 1), 2, wp, 2 * cin_pad)

    # ---- weights: (Cout, Cin, 3, 3) -> per-kh fused/odd-tap matrices ---------
    w = jnp.transpose(weight_oihw, (2, 3, 1, 0))                        # (3,3,Cin,Cout)
    w = jnp.pad(w, ((0, 0), (0, 0), (0, cin_pad - Cin), (0, cout_pad - Cout)))
    wa = w[:, 0:2].reshape(3, 2 * cin_pad, cout_pad).astype(jnp.bfloat16)
    wb = w[:, 2].astype(jnp.bfloat16)                                   # (3,cin_pad,cout_pad)
    b = jnp.pad(bias, (0, cout_pad - Cout)).reshape(1, cout_pad).astype(jnp.float32)

    kernel = functools.partial(_grid_reduction_kernel, hout=Hout,
                               wout_pad=wout_pad, cin_pad=cin_pad,
                               cout_pad=cout_pad)

    # ---- hot path: one image per grid step, BlockSpec-pipelined --------------
    out = pl.pallas_call(
        kernel,
        out_shape=jax.ShapeDtypeStruct((N * m, ctot), jnp.float32),
        grid_spec=pltpu.PrefetchScalarGridSpec(
            num_scalar_prefetch=0,
            grid=(N,),
            in_specs=[
                pl.BlockSpec((Hout + 1, 2, wp, 2 * cin_pad),
                             lambda n: (n, 0, 0, 0)),
                pl.BlockSpec((3, 2 * cin_pad, cout_pad), lambda n: (0, 0, 0)),
                pl.BlockSpec((3, cin_pad, cout_pad), lambda n: (0, 0, 0)),
                pl.BlockSpec((1, cout_pad), lambda n: (0, 0)),
            ],
            out_specs=pl.BlockSpec((m, ctot), lambda n: (n, 0)),
        ),
        compiler_params=pltpu.CompilerParams(
            dimension_semantics=("parallel",),
            vmem_limit_bytes=32 * 1024 * 1024,
        ),
    )(xg, wa, wb, b)

    # ---- epilogue: strip padding, back to NCHW --------------------------------
    if Cout == cout_pad:
        # conv || pool are already contiguous on a lane-aligned boundary:
        # no jnp.concatenate needed (e.g. Cout = 384 in production Inception).
        merged = out[:, :Cout + Cin].reshape(N, Hout, wout_pad, Cout + Cin)
        merged = merged[:, :, :Wout, :]
        return jnp.transpose(merged, (0, 3, 1, 2))

    conv = out[:, :Cout].reshape(N, Hout, wout_pad, Cout)[:, :, :Wout, :]
    pool = out[:, cout_pad:cout_pad + Cin].reshape(N, Hout, wout_pad, Cin)[:, :, :Wout, :]
    return jnp.concatenate([jnp.transpose(conv, (0, 3, 1, 2)),
                            jnp.transpose(pool, (0, 3, 1, 2))], axis=1)


def _reference(x, weight, bias):
    conv = jax.lax.conv_general_dilated(
        x, weight, window_strides=(2, 2), padding='VALID',
        dimension_numbers=('NCHW', 'OIHW', 'NCHW'))
    conv = conv + bias.reshape(1, -1, 1, 1)
    pool = jax.lax.reduce_window(
        x, -jnp.inf, jax.lax.max,
        window_dimensions=(1, 1, 3, 3),
        window_strides=(1, 1, 2, 2),
        padding='VALID')
    return jnp.concatenate([conv, pool], axis=1)


if __name__ == "__main__":
    key = jax.random.PRNGKey(0)
    k_x, k_w, k_b = jax.random.split(key, 3)

    N, Cin, H, W = 2, 4, 16, 16
    Cout = 8

    x = jax.random.normal(k_x, (N, Cin, H, W), dtype=jnp.float32)
    weight = jax.random.normal(k_w, (Cout, Cin, 3, 3), dtype=jnp.float32) * 0.1
    bias = jax.random.normal(k_b, (Cout,), dtype=jnp.float32) * 0.1

    out = grid_reduction(x, weight, bias)
    out = jax.block_until_ready(out)

    ref = jax.block_until_ready(_reference(x, weight, bias))
    assert out.shape == (N, Cout + Cin, 7, 7), out.shape
    # bf16 MXU operands (and bf16-rounded pool inputs) vs f32 reference.
    np.testing.assert_allclose(np.asarray(out), np.asarray(ref),
                               rtol=5e-2, atol=5e-2)
    print("KERNEL_OK")
</pallas_src>

<mosaic_0001>
module attributes {stable_mosaic.version = 11 : i64} {
  func.func @_grid_reduction_kernel(%arg0: i32, %arg1: memref<8x2x9x256xbf16, #tpu.memory_space<vmem>>, %arg2: memref<3x256x128xbf16, #tpu.memory_space<vmem>>, %arg3: memref<3x128x128xbf16, #tpu.memory_space<vmem>>, %arg4: memref<1x128xf32, #tpu.memory_space<vmem>>, %arg5: memref<56x256xf32, #tpu.memory_space<vmem>>) attributes {dimension_semantics = [#tpu.dimension_semantics<parallel>], iteration_bounds = array<i64: 2>, scalar_prefetch = 0 : i64, scratch_operands = 0 : i64, tpu.core_type = #tpu.core_type<tc>, window_params = [{transform_indices = @transform_0, window_bounds = array<i64: 8, 2, 9, 256>}, {pipeline_mode = #tpu.pipeline_mode<synchronous>, transform_indices = @transform_1, window_bounds = array<i64: 3, 256, 128>}, {pipeline_mode = #tpu.pipeline_mode<synchronous>, transform_indices = @transform_2, window_bounds = array<i64: 3, 128, 128>}, {pipeline_mode = #tpu.pipeline_mode<synchronous>, transform_indices = @transform_3, window_bounds = array<i64: 1, 128>}, {transform_indices = @transform_4, window_bounds = array<i64: 56, 256>}]} {
    %c0 = arith.constant 0 : index
    %c0_0 = arith.constant 0 : index
    %c0_1 = arith.constant 0 : index
    %c0_2 = arith.constant 0 : index
    %0 = vector.load %arg1[%c0, %c0_0, %c0_1, %c0_2] : memref<8x2x9x256xbf16, #tpu.memory_space<vmem>>, vector<8x2x9x256xbf16>
    %cst = arith.constant 0.000000e+00 : f32
    %1 = vector.broadcast %cst : f32 to vector<56x128xf32>
    %2 = vector.extract_strided_slice %0 {offsets = [0, 0, 0, 0], sizes = [7, 1, 9, 256], strides = [1, 1, 1, 1]} : vector<8x2x9x256xbf16> to vector<7x1x9x256xbf16>
    %3 = vector.shape_cast %2 : vector<7x1x9x256xbf16> to vector<7x9x256xbf16>
    %4 = vector.extract_strided_slice %3 {offsets = [0, 0, 0], sizes = [7, 8, 256], strides = [1, 1, 1]} : vector<7x9x256xbf16> to vector<7x8x256xbf16>
    %5 = vector.shape_cast %4 : vector<7x8x256xbf16> to vector<56x256xbf16>
    %6 = vector.extract_strided_slice %3 {offsets = [0, 1, 0], sizes = [7, 8, 128], strides = [1, 1, 1]} : vector<7x9x256xbf16> to vector<7x8x128xbf16>
    %7 = vector.shape_cast %6 : vector<7x8x128xbf16> to vector<56x128xbf16>
    %c0_3 = arith.constant 0 : index
    %c0_4 = arith.constant 0 : index
    %c0_5 = arith.constant 0 : index
    %8 = vector.load %arg2[%c0_3, %c0_4, %c0_5] : memref<3x256x128xbf16, #tpu.memory_space<vmem>>, vector<1x256x128xbf16>
    %9 = vector.shape_cast %8 : vector<1x256x128xbf16> to vector<256x128xbf16>
    %cst_6 = arith.constant dense<0.000000e+00> : vector<56x128xf32>
    %10 = tpu.matmul %5, %9, %cst_6 {dimension_numbers = #tpu.dot_dimension_numbers<[1], [0], [0], [1], [0, 0, 1, 1], [], []>} : vector<56x256xbf16>, vector<256x128xbf16>, vector<56x128xf32> -> vector<56x128xf32>
    %11 = arith.addf %1, %10 : vector<56x128xf32>
    %c0_7 = arith.constant 0 : index
    %c0_8 = arith.constant 0 : index
    %c0_9 = arith.constant 0 : index
    %12 = vector.load %arg3[%c0_7, %c0_8, %c0_9] : memref<3x128x128xbf16, #tpu.memory_space<vmem>>, vector<1x128x128xbf16>
    %13 = vector.shape_cast %12 : vector<1x128x128xbf16> to vector<128x128xbf16>
    %cst_10 = arith.constant dense<0.000000e+00> : vector<56x128xf32>
    %14 = tpu.matmul %7, %13, %cst_10 {dimension_numbers = #tpu.dot_dimension_numbers<[1], [0], [0], [1], [0, 0, 1, 1], [], []>} : vector<56x128xbf16>, vector<128x128xbf16>, vector<56x128xf32> -> vector<56x128xf32>
    %15 = arith.addf %11, %14 : vector<56x128xf32>
    %16 = vector.extract_strided_slice %5 {offsets = [0, 0], sizes = [56, 128], strides = [1, 1]} : vector<56x256xbf16> to vector<56x128xbf16>
    %17 = arith.extf %16 : vector<56x128xbf16> to vector<56x128xf32>
    %18 = vector.extract_strided_slice %5 {offsets = [0, 128], sizes = [56, 128], strides = [1, 1]} : vector<56x256xbf16> to vector<56x128xbf16>
    %19 = arith.extf %18 : vector<56x128xbf16> to vector<56x128xf32>
    %20 = arith.extf %7 : vector<56x128xbf16> to vector<56x128xf32>
    %21 = arith.maximumf %17, %19 : vector<56x128xf32>
    %22 = arith.maximumf %21, %20 : vector<56x128xf32>
    %23 = vector.extract_strided_slice %0 {offsets = [0, 1, 0, 0], sizes = [7, 1, 9, 256], strides = [1, 1, 1, 1]} : vector<8x2x9x256xbf16> to vector<7x1x9x256xbf16>
    %24 = vector.shape_cast %23 : vector<7x1x9x256xbf16> to vector<7x9x256xbf16>
    %25 = vector.extract_strided_slice %24 {offsets = [0, 0, 0], sizes = [7, 8, 256], strides = [1, 1, 1]} : vector<7x9x256xbf16> to vector<7x8x256xbf16>
    %26 = vector.shape_cast %25 : vector<7x8x256xbf16> to vector<56x256xbf16>
    %27 = vector.extract_strided_slice %24 {offsets = [0, 1, 0], sizes = [7, 8, 128], strides = [1, 1, 1]} : vector<7x9x256xbf16> to vector<7x8x128xbf16>
    %28 = vector.shape_cast %27 : vector<7x8x128xbf16> to vector<56x128xbf16>
    %c1 = arith.constant 1 : index
    %c0_11 = arith.constant 0 : index
    %c0_12 = arith.constant 0 : index
    %29 = vector.load %arg2[%c1, %c0_11, %c0_12] : memref<3x256x128xbf16, #tpu.memory_space<vmem>>, vector<1x256x128xbf16>
    %30 = vector.shape_cast %29 : vector<1x256x128xbf16> to vector<256x128xbf16>
    %cst_13 = arith.constant dense<0.000000e+00> : vector<56x128xf32>
    %31 = tpu.matmul %26, %30, %cst_13 {dimension_numbers = #tpu.dot_dimension_numbers<[1], [0], [0], [1], [0, 0, 1, 1], [], []>} : vector<56x256xbf16>, vector<256x128xbf16>, vector<56x128xf32> -> vector<56x128xf32>
    %32 = arith.addf %15, %31 : vector<56x128xf32>
    %c1_14 = arith.constant 1 : index
    %c0_15 = arith.constant 0 : index
    %c0_16 = arith.constant 0 : index
    %33 = vector.load %arg3[%c1_14, %c0_15, %c0_16] : memref<3x128x128xbf16, #tpu.memory_space<vmem>>, vector<1x128x128xbf16>
    %34 = vector.shape_cast %33 : vector<1x128x128xbf16> to vector<128x128xbf16>
    %cst_17 = arith.constant dense<0.000000e+00> : vector<56x128xf32>
    %35 = tpu.matmul %28, %34, %cst_17 {dimension_numbers = #tpu.dot_dimension_numbers<[1], [0], [0], [1], [0, 0, 1, 1], [], []>} : vector<56x128xbf16>, vector<128x128xbf16>, vector<56x128xf32> -> vector<56x128xf32>
    %36 = arith.addf %32, %35 : vector<56x128xf32>
    %37 = vector.extract_strided_slice %26 {offsets = [0, 0], sizes = [56, 128], strides = [1, 1]} : vector<56x256xbf16> to vector<56x128xbf16>
    %38 = arith.extf %37 : vector<56x128xbf16> to vector<56x128xf32>
    %39 = vector.extract_strided_slice %26 {offsets = [0, 128], sizes = [56, 128], strides = [1, 1]} : vector<56x256xbf16> to vector<56x128xbf16>
    %40 = arith.extf %39 : vector<56x128xbf16> to vector<56x128xf32>
    %41 = arith.extf %28 : vector<56x128xbf16> to vector<56x128xf32>
    %42 = arith.maximumf %38, %40 : vector<56x128xf32>
    %43 = arith.maximumf %42, %41 : vector<56x128xf32>
    %44 = arith.maximumf %22, %43 : vector<56x128xf32>
    %45 = vector.extract_strided_slice %0 {offsets = [1, 0, 0, 0], sizes = [7, 1, 9, 256], strides = [1, 1, 1, 1]} : vector<8x2x9x256xbf16> to vector<7x1x9x256xbf16>
    %46 = vector.shape_cast %45 : vector<7x1x9x256xbf16> to vector<7x9x256xbf16>
    %47 = vector.extract_strided_slice %46 {offsets = [0, 0, 0], sizes = [7, 8, 256], strides = [1, 1, 1]} : vector<7x9x256xbf16> to vector<7x8x256xbf16>
    %48 = vector.shape_cast %47 : vector<7x8x256xbf16> to vector<56x256xbf16>
    %49 = vector.extract_strided_slice %46 {offsets = [0, 1, 0], sizes = [7, 8, 128], strides = [1, 1, 1]} : vector<7x9x256xbf16> to vector<7x8x128xbf16>
    %50 = vector.shape_cast %49 : vector<7x8x128xbf16> to vector<56x128xbf16>
    %c2 = arith.constant 2 : index
    %c0_18 = arith.constant 0 : index
    %c0_19 = arith.constant 0 : index
    %51 = vector.load %arg2[%c2, %c0_18, %c0_19] : memref<3x256x128xbf16, #tpu.memory_space<vmem>>, vector<1x256x128xbf16>
    %52 = vector.shape_cast %51 : vector<1x256x128xbf16> to vector<256x128xbf16>
    %cst_20 = arith.constant dense<0.000000e+00> : vector<56x128xf32>
    %53 = tpu.matmul %48, %52, %cst_20 {dimension_numbers = #tpu.dot_dimension_numbers<[1], [0], [0], [1], [0, 0, 1, 1], [], []>} : vector<56x256xbf16>, vector<256x128xbf16>, vector<56x128xf32> -> vector<56x128xf32>
    %54 = arith.addf %36, %53 : vector<56x128xf32>
    %c2_21 = arith.constant 2 : index
    %c0_22 = arith.constant 0 : index
    %c0_23 = arith.constant 0 : index
    %55 = vector.load %arg3[%c2_21, %c0_22, %c0_23] : memref<3x128x128xbf16, #tpu.memory_space<vmem>>, vector<1x128x128xbf16>
    %56 = vector.shape_cast %55 : vector<1x128x128xbf16> to vector<128x128xbf16>
    %cst_24 = arith.constant dense<0.000000e+00> : vector<56x128xf32>
    %57 = tpu.matmul %50, %56, %cst_24 {dimension_numbers = #tpu.dot_dimension_numbers<[1], [0], [0], [1], [0, 0, 1, 1], [], []>} : vector<56x128xbf16>, vector<128x128xbf16>, vector<56x128xf32> -> vector<56x128xf32>
    %58 = arith.addf %54, %57 : vector<56x128xf32>
    %59 = vector.extract_strided_slice %48 {offsets = [0, 0], sizes = [56, 128], strides = [1, 1]} : vector<56x256xbf16> to vector<56x128xbf16>
    %60 = arith.extf %59 : vector<56x128xbf16> to vector<56x128xf32>
    %61 = vector.extract_strided_slice %48 {offsets = [0, 128], sizes = [56, 128], strides = [1, 1]} : vector<56x256xbf16> to vector<56x128xbf16>
    %62 = arith.extf %61 : vector<56x128xbf16> to vector<56x128xf32>
    %63 = arith.extf %50 : vector<56x128xbf16> to vector<56x128xf32>
    %64 = arith.maximumf %60, %62 : vector<56x128xf32>
    %65 = arith.maximumf %64, %63 : vector<56x128xf32>
    %66 = arith.maximumf %44, %65 : vector<56x128xf32>
    %c0_25 = arith.constant 0 : index
    %c0_26 = arith.constant 0 : index
    %67 = vector.load %arg4[%c0_25, %c0_26] : memref<1x128xf32, #tpu.memory_space<vmem>>, vector<1x128xf32>
    %68 = vector.broadcast %67 : vector<1x128xf32> to vector<56x128xf32>
    %69 = arith.addf %58, %68 : vector<56x128xf32>
    %c0_27 = arith.constant 0 : index
    %c0_28 = arith.constant 0 : index
    %70 = vector.load %arg5[%c0_27, %c0_28] : memref<56x256xf32, #tpu.memory_space<vmem>>, vector<56x128xf32>
    tpu.vector_store %arg5[%c0_27, %c0_28], %69 {strides = array<i32>} : memref<56x256xf32, #tpu.memory_space<vmem>>, vector<56x128xf32>,
    %c0_29 = arith.constant 0 : index
    %c128 = arith.constant 128 : index
    %71 = vector.load %arg5[%c0_29, %c128] : memref<56x256xf32, #tpu.memory_space<vmem>>, vector<56x128xf32>
    tpu.vector_store %arg5[%c0_29, %c128], %66 {strides = array<i32>} : memref<56x256xf32, #tpu.memory_space<vmem>>, vector<56x128xf32>,
    return
  }
  func.func @transform_0(%arg0: i32) -> (i32, i32, i32, i32) {
    %c0_i32 = arith.constant 0 : i32
    %c0_i32_0 = arith.constant 0 : i32
    %c0_i32_1 = arith.constant 0 : i32
    %c0_i32_2 = arith.constant 0 : i32
    return %arg0, %c0_i32, %c0_i32_0, %c0_i32_1 : i32, i32, i32, i32
  }
  func.func @transform_1(%arg0: i32) -> (i32, i32, i32) {
    %c0_i32 = arith.constant 0 : i32
    %c0_i32_0 = arith.constant 0 : i32
    %c0_i32_1 = arith.constant 0 : i32
    %c0_i32_2 = arith.constant 0 : i32
    return %c0_i32, %c0_i32_0, %c0_i32_1 : i32, i32, i32
  }
  func.func @transform_2(%arg0: i32) -> (i32, i32, i32) {
    %c0_i32 = arith.constant 0 : i32
    %c0_i32_0 = arith.constant 0 : i32
    %c0_i32_1 = arith.constant 0 : i32
    %c0_i32_2 = arith.constant 0 : i32
    return %c0_i32, %c0_i32_0, %c0_i32_1 : i32, i32, i32
  }
  func.func @transform_3(%arg0: i32) -> (i32, i32) {
    %c0_i32 = arith.constant 0 : i32
    %c0_i32_0 = arith.constant 0 : i32
    %c0_i32_1 = arith.constant 0 : i32
    return %c0_i32, %c0_i32_0 : i32, i32
  }
  func.func @transform_4(%arg0: i32) -> (i32, i32) {
    %c0_i32 = arith.constant 0 : i32
    %c0_i32_0 = arith.constant 0 : i32
    return %arg0, %c0_i32 : i32, i32
  }
}

</mosaic_0001>

<llo_original>
// kernel: tpu_custom_call.1
$region0: #{tpu_custom_call.1}
  #allocation0 [shape = 'u32[]', space=smem, size = 0x4, offset = 0x4, fixed_abs, tag = 'smem constant byte address 0x4 - core index']
  #allocation1 [shape = 'u32[144,128]{1,0:T(1,128)}', space=vmem, size = 0x12000, scoped, tag = 'internal scratch']
  %s0 = inlined_call_operand.vmem [shape: bf16[16,2,9,256], index: 0, kind: input, shape index: {}]
  %s1 = inlined_call_operand.vmem [shape: bf16[3,256,128], index: 1, kind: input, shape index: {}]
  %s2 = inlined_call_operand.vmem [shape: bf16[3,128,128], index: 2, kind: input, shape index: {}]
  %s3 = inlined_call_operand.vmem [shape: f32[1,128], index: 3, kind: input, shape index: {}]
  %s4 = inlined_call_operand.hbm [shape: f32[112,256], index: 4, kind: output, shape index: {}]
  %s5 = sld [smem:[#allocation0]]
  $region49: #{tpu_custom_call.1} parent=0
    _
  %s7 = ssub.s32 1, %s5
  %s8 = scalar_select 0, %s7, %s5
  $region1: #{tpu_custom_call.1} parent=0
    #allocation2 [shape = 'u8[114688]{0}', space=vmem, size = 0x1c000, scoped, tag = 'output window, operand 0']
    #allocation3 [shape = 's32[2]{0}', space=sflag, size = 0x8, scoped, tag = 'scoped memory for tpu_custom_call.1']
    %9 = vsyncpa [#allocation3], 0
    %s10 = scalar_lea.sflag [#allocation3], 1
    %11 = vsyncpa %s10, 0
    loop: start=0, step=1, limit=4
    $region2: #{tpu_custom_call.1} parent=1 // loop_pre_header
      _
    $region3: #{tpu_custom_call.1} parent=1 // loop_header
      %s13 = sphi 0, %s17
      %p14 = scmp.ge.s32.totalorder %s13, 4
      %s23 = sphi 0, %s25
      %s26 = sphi 0, %s23
      %s27 = sphi 0, %s26
      %s43 = sphi 0, %s27
      %s47 = sphi 0, %s47
      %s49 = sphi 0, %s47
      %s50 = sphi 0, %s49
      %s64 = sphi 0, %s50
      %s68 = sphi 0, %s68
      %s70 = sphi 0, %s68
      %s71 = sphi 0, %s70
      %s85 = sphi 0, %s71
      %s89 = sphi 0, %s89
      %s91 = sphi 0, %s89
      %s92 = sphi 0, %s91
      %s106 = sphi 0, %s92
      %s112 = sphi 0, %s114
      %s115 = sphi 0, %s112
      %s116 = sphi 0, %s115
      %s132 = sphi 0, %s116
    $region4: #{tpu_custom_call.1} parent=1 // loop_header_branch
      %16 = sbr.rel (%p14) target = $region8
    $region5: #{tpu_custom_call.1} parent=1 // loop_body
      %s18 = ssub.s32 %s13, 1
      %s19 = ssub.s32 %s13, 2
      %s20 = sadd.s32 %s13, 1
      %s21 = ssub.s32 %s13, %s20
      %p22 = scmp.eq.s32.totalorder %s21, 0
      %s24 = sadd.s32 %s23, 1
      %s25 = scalar_select %p22, %s23, %s24
      %p28 = pneg %p22
      %p29 = scmp.eq.s32.totalorder %s13, 1
      %p30 = por %p28, %p29
      %p31 = scmp.ne.s32.totalorder %s23, %s26
      %p32 = scmp.eq.s32.totalorder %s13, 0
      %p33 = por %p31, %p32
      %p34 = scmp.ne.s32.totalorder %s23, %s26
      %p35 = scmp.eq.s32.totalorder %s18, 1
      %p36 = por %p34, %p35
      %p37 = scmp.ne.s32.totalorder %s26, %s27
      %p38 = scmp.eq.s32.totalorder %s18, 0
      %p39 = por %p37, %p38
      %p40 = scmp.ne.s32.totalorder %s26, %s27
      %p41 = scmp.eq.s32.totalorder %s19, 1
      %p42 = por %p40, %p41
      %p44 = scmp.ne.s32.totalorder %s27, %s43
      %p45 = scmp.eq.s32.totalorder %s19, 0
      %p46 = por %p44, %p45
      %s48 = sadd.s32 %s47, 1
      %p51 = scmp.eq.s32.totalorder %s13, 1
      %p52 = scmp.ne.s32.totalorder %s47, %s49
      %p53 = scmp.eq.s32.totalorder %s13, 0
      %p54 = por %p52, %p53
      %p55 = scmp.ne.s32.totalorder %s47, %s49
      %p56 = scmp.eq.s32.totalorder %s18, 1
      %p57 = por %p55, %p56
      %p58 = scmp.ne.s32.totalorder %s49, %s50
      %p59 = scmp.eq.s32.totalorder %s18, 0
      %p60 = por %p58, %p59
      %p61 = scmp.ne.s32.totalorder %s49, %s50
      %p62 = scmp.eq.s32.totalorder %s19, 1
      %p63 = por %p61, %p62
      %p65 = scmp.ne.s32.totalorder %s50, %s64
      %p66 = scmp.eq.s32.totalorder %s19, 0
      %p67 = por %p65, %p66
      %s69 = sadd.s32 %s68, 1
      %p72 = scmp.eq.s32.totalorder %s13, 1
      %p73 = scmp.ne.s32.totalorder %s68, %s70
      %p74 = scmp.eq.s32.totalorder %s13, 0
      %p75 = por %p73, %p74
      %p76 = scmp.ne.s32.totalorder %s68, %s70
      %p77 = scmp.eq.s32.totalorder %s18, 1
      %p78 = por %p76, %p77
      %p79 = scmp.ne.s32.totalorder %s70, %s71
      %p80 = scmp.eq.s32.totalorder %s18, 0
      %p81 = por %p79, %p80
      %p82 = scmp.ne.s32.totalorder %s70, %s71
      %p83 = scmp.eq.s32.totalorder %s19, 1
      %p84 = por %p82, %p83
      %p86 = scmp.ne.s32.totalorder %s71, %s85
      %p87 = scmp.eq.s32.totalorder %s19, 0
      %p88 = por %p86, %p87
      %s90 = sadd.s32 %s89, 1
      %p93 = scmp.eq.s32.totalorder %s13, 1
      %p94 = scmp.ne.s32.totalorder %s89, %s91
      %p95 = scmp.eq.s32.totalorder %s13, 0
      %p96 = por %p94, %p95
      %p97 = scmp.ne.s32.totalorder %s89, %s91
      %p98 = scmp.eq.s32.totalorder %s18, 1
      %p99 = por %p97, %p98
      %p100 = scmp.ne.s32.totalorder %s91, %s92
      %p101 = scmp.eq.s32.totalorder %s18, 0
      %p102 = por %p100, %p101
      %p103 = scmp.ne.s32.totalorder %s91, %s92
      %p104 = scmp.eq.s32.totalorder %s19, 1
      %p105 = por %p103, %p104
      %p107 = scmp.ne.s32.totalorder %s92, %s106
      %p108 = scmp.eq.s32.totalorder %s19, 0
      %p109 = por %p107, %p108
      %s110 = ssub.s32 %s13, %s20
      %p111 = scmp.eq.s32.totalorder %s110, 0
      %s113 = sadd.s32 %s112, 1
      %s114 = scalar_select %p111, %s112, %s113
      %p117 = pneg %p111
      %p118 = scmp.eq.s32.totalorder %s13, 1
      %p119 = por %p117, %p118
      %p120 = scmp.ne.s32.totalorder %s112, %s115
      %p121 = scmp.eq.s32.totalorder %s13, 0
      %p122 = por %p120, %p121
      %p123 = scmp.ne.s32.totalorder %s112, %s115
      %p124 = scmp.eq.s32.totalorder %s18, 1
      %p125 = por %p123, %p124
      %p126 = scmp.ne.s32.totalorder %s115, %s116
      %p127 = scmp.eq.s32.totalorder %s18, 0
      %p128 = por %p126, %p127
      %p129 = scmp.ne.s32.totalorder %s115, %s116
      %p130 = scmp.eq.s32.totalorder %s19, 1
      %p131 = por %p129, %p130
      %p133 = scmp.ne.s32.totalorder %s116, %s132
      %p134 = scmp.eq.s32.totalorder %s19, 0
      %p135 = por %p133, %p134
      %p136 = scmp.le.s32.totalorder 1, %s13
      %p137 = scmp.lt.s32.totalorder %s13, 3
      %p138 = pnand %p136, %p137
      %p139 = pneg %p138
      // Predicated region
      $region9: #{tpu_custom_call.1} parent=5 // pred_check
        _
      $region10: #{tpu_custom_call.1} parent=5 // pred_check_branch
        %141 = sbr.rel (%p138) target = $region12
      $region11: #{tpu_custom_call.1} parent=5 // pred_region
        %s142 = ssub.s32 %s13, 1
        // Predicated region
        $region13: #{tpu_custom_call.1} parent=11 // pred_check
          %p143 = pneg %p60
        $region14: #{tpu_custom_call.1} parent=11 // pred_check_branch
          %145 = sbr.rel (%p143) target = $region16
        $region15: #{tpu_custom_call.1} parent=11 // pred_region
          _
        $region16: #{tpu_custom_call.1} parent=11 // pred_fallthru
          _
        // Predicated region
        $region17: #{tpu_custom_call.1} parent=11 // pred_check
          %p146 = pneg %p81
        $region18: #{tpu_custom_call.1} parent=11 // pred_check_branch
          %148 = sbr.rel (%p146) target = $region20
        $region19: #{tpu_custom_call.1} parent=11 // pred_region
          _
        $region20: #{tpu_custom_call.1} parent=11 // pred_fallthru
          _
        // Predicated region
        $region21: #{tpu_custom_call.1} parent=11 // pred_check
          %p149 = pneg %p102
        $region22: #{tpu_custom_call.1} parent=11 // pred_check_branch
          %151 = sbr.rel (%p149) target = $region24
        $region23: #{tpu_custom_call.1} parent=11 // pred_region
          _
        $region24: #{tpu_custom_call.1} parent=11 // pred_fallthru
          _
      $region12: #{tpu_custom_call.1} parent=5 // pred_fallthru
        _
      %p152 = scmp.lt.s32.totalorder %s13, 2
      // Predicated region
      $region25: #{tpu_custom_call.1} parent=5 // pred_check
        %p153 = pneg %p152
      $region26: #{tpu_custom_call.1} parent=5 // pred_check_branch
        %155 = sbr.rel (%p153) target = $region28
      $region27: #{tpu_custom_call.1} parent=5 // pred_region
        // Predicated region
        $region29: #{tpu_custom_call.1} parent=27 // pred_check
          %p156 = pneg %p33
        $region30: #{tpu_custom_call.1} parent=27 // pred_check_branch
          %158 = sbr.rel (%p156) target = $region32
        $region31: #{tpu_custom_call.1} parent=27 // pred_region
          %s159 = smul.u32 8, %s13
          %p160 = scmp.lt.s32.totalorder %s159, 15
          %s161 = scalar_select %p160, %s159, 15
          %s162 = smul.addr %s161, 8
          %s163 = smul.addr %s162, 4
          %s164 = scalar_lea.vmem %s0, %s163
          %s165 = smul.u32 8, %s13
        $region32: #{tpu_custom_call.1} parent=27 // pred_fallthru
          _
      $region28: #{tpu_custom_call.1} parent=5 // pred_fallthru
        _
      %p166 = scmp.le.s32.totalorder 1, %s13
      %p167 = scmp.lt.s32.totalorder %s13, 3
      %p168 = pnand %p166, %p167
      %p169 = pneg %p168
      // Predicated region
      $region33: #{tpu_custom_call.1} parent=5 // pred_check
        _
      $region34: #{tpu_custom_call.1} parent=5 // pred_check_branch
        %171 = sbr.rel (%p168) target = $region36
      $region35: #{tpu_custom_call.1} parent=5 // pred_region
        %s172 = ssub.s32 %s13, 1
        %s173 = smul.u32 8, %s18
        %p174 = scmp.lt.s32.totalorder %s173, 15
        %s175 = scalar_select %p174, %s173, 15
        %s176 = smul.addr %s175, 8
        %s177 = smul.addr %s176, 4
        %s178 = scalar_lea.vmem %s0, %s177
        %p179 = pneg %p39
        %p180 = pneg %p36
        %p181 = pneg %p60
        %p182 = pneg %p57
        %p183 = pneg %p81
        %p184 = pneg %p78
        %p185 = pneg %p102
        %p186 = pneg %p99
        %p187 = pneg %p128
        %p188 = pneg %p125
        %s189 = sand.u32 %s115, 1
        %s190 = scalar_lea.sflag [#allocation3], %s189
        %s191 = sand.u32 %s115, 1
        %s192 = smul.addr %s191, 112
        %s193 = scalar_lea.vmem [#allocation2], %s192
        %s194 = smul.u32 8, %s18
        %p195 = scmp.lt.s32.totalorder %s194, 15
        %s196 = scalar_select %p195, %s194, 15
        %s197 = smul.addr %s196, 8
        %s198 = smul.addr %s197, 4
        %s199 = scalar_lea.vmem %s0, %s198
        %s200 = smul.u32 8, %s18
        %s201 = smul.u32 7, %s18
        %v203 = vld [vmem:[%s199] sm:$0xff]
        %v204 = vld [vmem:[%s199 + $0x8] sm:$0x11]
        %v205 = vld [vmem:[%s199 + $0x10] sm:$0xff]
        %v206 = vld [vmem:[%s199 + $0x18] sm:$0x11]
        %v207 = vld [vmem:[%s199 + $0x20] sm:$0xff]
        %v208 = vld [vmem:[%s199 + $0x28] sm:$0x11]
        %v209 = vld [vmem:[%s199 + $0x30] sm:$0xff]
        %v210 = vld [vmem:[%s199 + $0x38] sm:$0x11]
        %v211 = vld [vmem:[%s199 + $0x40] sm:$0xff]
        %v212 = vld [vmem:[%s199 + $0x48] sm:$0x11]
        %v213 = vld [vmem:[%s199 + $0x50] sm:$0xff]
        %v214 = vld [vmem:[%s199 + $0x58] sm:$0x11]
        %v215 = vld [vmem:[%s199 + $0x60] sm:$0xff]
        %v216 = vld [vmem:[%s199 + $0x68] sm:$0x11]
        %v217 = vld [vmem:[%s199 + $0x70] sm:$0xff]
        %v218 = vld [vmem:[%s199 + $0x78] sm:$0x11]
        %v219 = vld [vmem:[%s199 + $0x80] sm:$0xff]
        %v220 = vld [vmem:[%s199 + $0x88] sm:$0x11]
        %v221 = vld [vmem:[%s199 + $0x90] sm:$0xff]
        %v222 = vld [vmem:[%s199 + $0x98] sm:$0x11]
        %v223 = vld [vmem:[%s199 + $0xa0] sm:$0xff]
        %v224 = vld [vmem:[%s199 + $0xa8] sm:$0x11]
        %v225 = vld [vmem:[%s199 + $0xb0] sm:$0xff]
        %v226 = vld [vmem:[%s199 + $0xb8] sm:$0x11]
        %v227 = vld [vmem:[%s199 + $0xc0] sm:$0xff]
        %v228 = vld [vmem:[%s199 + $0xc8] sm:$0x11]
        %v229 = vld [vmem:[%s199 + $0xd0] sm:$0xff]
        %v230 = vld [vmem:[%s199 + $0xd8] sm:$0x11]
        %v231 = vld [vmem:[%s199 + $0xe0] sm:$0xff]
        %v232 = vld [vmem:[%s199 + $0xe8] sm:$0x11]
        %vm233 = vsmask.f32 3328
        %vm234 = vsmask.f32 7440
        %vm235 = vmor %vm233, %vm234
        %v237 = vshrl.u32 %v203, 16
        %v239 = vrot.slane %v237, 4
        %v240 = vshll.u32 %v203, 16
        %v242 = vrot.slane %v240, 5
        %v243 = vor.u32 %v239, %v242
        %v244 = vrot.slane %v243, 4
        %v246 = vshll.u32 %v204, 16
        %v248 = vrot.slane %v246, 5
        %v249 = vsel %vm235, %v244, %v248
        %v251 = vshrl.u32 %v207, 16
        %v253 = vrot.slane %v251, 4
        %v254 = vshll.u32 %v207, 16
        %v256 = vrot.slane %v254, 5
        %v257 = vor.u32 %v253, %v256
        %v258 = vrot.slane %v257, 4
        %v260 = vshll.u32 %v208, 16
        %v262 = vrot.slane %v260, 5
        %v263 = vsel %vm235, %v258, %v262
        %v265 = vshrl.u32 %v211, 16
        %v267 = vrot.slane %v265, 4
        %v268 = vshll.u32 %v211, 16
        %v270 = vrot.slane %v268, 5
        %v271 = vor.u32 %v267, %v270
        %v272 = vrot.slane %v271, 4
        %v274 = vshll.u32 %v212, 16
        %v276 = vrot.slane %v274, 5
        %v277 = vsel %vm235, %v272, %v276
        %v279 = vshrl.u32 %v215, 16
        %v281 = vrot.slane %v279, 4
        %v282 = vshll.u32 %v215, 16
        %v284 = vrot.slane %v282, 5
        %v285 = vor.u32 %v281, %v284
        %v286 = vrot.slane %v285, 4
        %v288 = vshll.u32 %v216, 16
        %v290 = vrot.slane %v288, 5
        %v291 = vsel %vm235, %v286, %v290
        %v293 = vshrl.u32 %v219, 16
        %v295 = vrot.slane %v293, 4
        %v296 = vshll.u32 %v219, 16
        %v298 = vrot.slane %v296, 5
        %v299 = vor.u32 %v295, %v298
        %v300 = vrot.slane %v299, 4
        %v302 = vshll.u32 %v220, 16
        %v304 = vrot.slane %v302, 5
        %v305 = vsel %vm235, %v300, %v304
        %v307 = vshrl.u32 %v223, 16
        %v309 = vrot.slane %v307, 4
        %v310 = vshll.u32 %v223, 16
        %v312 = vrot.slane %v310, 5
        %v313 = vor.u32 %v309, %v312
        %v314 = vrot.slane %v313, 4
        %v316 = vshll.u32 %v224, 16
        %v318 = vrot.slane %v316, 5
        %v319 = vsel %vm235, %v314, %v318
        %v321 = vshrl.u32 %v227, 16
        %v323 = vrot.slane %v321, 4
        %v324 = vshll.u32 %v227, 16
        %v326 = vrot.slane %v324, 5
        %v327 = vor.u32 %v323, %v326
        %v328 = vrot.slane %v327, 4
        %v330 = vshll.u32 %v228, 16
        %v332 = vrot.slane %v330, 5
        %v333 = vsel %vm235, %v328, %v332
        %v341 = vld [vmem:[%s1] sm:$0xf]
        %v342 = vld [vmem:[%s1 + $0x4] sm:$0xf]
        %v343 = vld [vmem:[%s1 + $0x8] sm:$0xf]
        %v344 = vld [vmem:[%s1 + $0xc] sm:$0xf]
        %v345 = vld [vmem:[%s1 + $0x10] sm:$0xf]
        %v346 = vld [vmem:[%s1 + $0x14] sm:$0xf]
        %v347 = vld [vmem:[%s1 + $0x18] sm:$0xf]
        %v348 = vld [vmem:[%s1 + $0x1c] sm:$0xf]
        %v349 = vld [vmem:[%s1 + $0x20] sm:$0xf]
        %v350 = vld [vmem:[%s1 + $0x24] sm:$0xf]
        %v351 = vld [vmem:[%s1 + $0x28] sm:$0xf]
        %v352 = vld [vmem:[%s1 + $0x2c] sm:$0xf]
        %v353 = vld [vmem:[%s1 + $0x30] sm:$0xf]
        %v354 = vld [vmem:[%s1 + $0x34] sm:$0xf]
        %v355 = vld [vmem:[%s1 + $0x38] sm:$0xf]
        %v356 = vld [vmem:[%s1 + $0x3c] sm:$0xf]
        %v357 = vld [vmem:[%s1 + $0x40] sm:$0xf]
        %v358 = vld [vmem:[%s1 + $0x44] sm:$0xf]
        %v359 = vld [vmem:[%s1 + $0x48] sm:$0xf]
        %v360 = vld [vmem:[%s1 + $0x4c] sm:$0xf]
        %v361 = vld [vmem:[%s1 + $0x50] sm:$0xf]
        %v362 = vld [vmem:[%s1 + $0x54] sm:$0xf]
        %v363 = vld [vmem:[%s1 + $0x58] sm:$0xf]
        %v364 = vld [vmem:[%s1 + $0x5c] sm:$0xf]
        %v365 = vld [vmem:[%s1 + $0x60] sm:$0xf]
        %v366 = vld [vmem:[%s1 + $0x64] sm:$0xf]
        %v367 = vld [vmem:[%s1 + $0x68] sm:$0xf]
        %v368 = vld [vmem:[%s1 + $0x6c] sm:$0xf]
        %v369 = vld [vmem:[%s1 + $0x70] sm:$0xf]
        %v370 = vld [vmem:[%s1 + $0x74] sm:$0xf]
        %v371 = vld [vmem:[%s1 + $0x78] sm:$0xf]
        %v372 = vld [vmem:[%s1 + $0x7c] sm:$0xf]
        %v373 = vld [vmem:[%s2] sm:$0xf]
        %v374 = vld [vmem:[%s2 + $0x4] sm:$0xf]
        %v375 = vld [vmem:[%s2 + $0x8] sm:$0xf]
        %v376 = vld [vmem:[%s2 + $0xc] sm:$0xf]
        %v377 = vld [vmem:[%s2 + $0x10] sm:$0xf]
        %v378 = vld [vmem:[%s2 + $0x14] sm:$0xf]
        %v379 = vld [vmem:[%s2 + $0x18] sm:$0xf]
        %v380 = vld [vmem:[%s2 + $0x1c] sm:$0xf]
        %v381 = vld [vmem:[%s2 + $0x20] sm:$0xf]
        %v382 = vld [vmem:[%s2 + $0x24] sm:$0xf]
        %v383 = vld [vmem:[%s2 + $0x28] sm:$0xf]
        %v384 = vld [vmem:[%s2 + $0x2c] sm:$0xf]
        %v385 = vld [vmem:[%s2 + $0x30] sm:$0xf]
        %v386 = vld [vmem:[%s2 + $0x34] sm:$0xf]
        %v387 = vld [vmem:[%s2 + $0x38] sm:$0xf]
        %v388 = vld [vmem:[%s2 + $0x3c] sm:$0xf]
        %v389 = vunpack.c.l.b16 %v249
        %v390 = vunpack.c.l.b16 %v263
        %v391 = vunpack.c.l.b16 %v277
        %v392 = vunpack.c.l.b16 %v291
        %v393 = vunpack.c.l.b16 %v305
        %v394 = vunpack.c.l.b16 %v319
        %v395 = vunpack.c.l.b16 %v333
        %v396 = vpack.c.b16 %v390, %v389
        %v397 = vpack.c.b16 %v392, %v391
        %v398 = vpack.c.b16 %v394, %v393
        %v399 = vpack.c.b16 %v395, %v395
        %v420 = vunpack.c.l.b16 %v373
        %v421 = vunpack.c.l.b16 %v374
        %v422 = vunpack.c.l.b16 %v375
        %v423 = vunpack.c.l.b16 %v376
        %v424 = vunpack.c.l.b16 %v377
        %v425 = vunpack.c.l.b16 %v378
        %v426 = vunpack.c.l.b16 %v379
        %v427 = vunpack.c.l.b16 %v380
        %v428 = vunpack.c.l.b16 %v381
        %v429 = vunpack.c.l.b16 %v382
        %v430 = vunpack.c.l.b16 %v383
        %v431 = vunpack.c.l.b16 %v384
        %v432 = vunpack.c.l.b16 %v385
        %v433 = vunpack.c.l.b16 %v386
        %v434 = vunpack.c.l.b16 %v387
        %v435 = vunpack.c.l.b16 %v388
        %v436 = vpack.c.b16 %v421, %v420
        %v437 = vpack.c.b16 %v423, %v422
        %v438 = vpack.c.b16 %v425, %v424
        %v439 = vpack.c.b16 %v427, %v426
        %v440 = vpack.c.b16 %v429, %v428
        %v441 = vpack.c.b16 %v431, %v430
        %v442 = vpack.c.b16 %v433, %v432
        %v443 = vpack.c.b16 %v435, %v434
        %452 = vmatprep.subr.bf16.mxu0 0
        %453 = vmatpush1.bf16.msra.mxu0 %v436
        %454 = vmatprep.subr.bf16.mxu0 0
        %455 = vmatpush1.bf16.msra.mxu0 %v437
        %456 = vmatprep.subr.bf16.mxu0 0
        %457 = vmatpush1.bf16.msra.mxu0 %v438
        %458 = vmatprep.subr.bf16.mxu0 0
        %459 = vmatpush1.bf16.msra.mxu0 %v439
        %460 = vmatprep.subr.bf16.mxu0 0
        %461 = vmatpush1.bf16.msra.mxu0 %v440
        %462 = vmatprep.subr.bf16.mxu0 0
        %463 = vmatpush1.bf16.msra.mxu0 %v441
        %464 = vmatprep.subr.bf16.mxu0 0
        %465 = vmatpush1.bf16.msra.mxu0 %v442
        %466 = vmatprep.subr.bf16.mxu0 0
        %467 = vmatpush1.bf16.msra.mxu0 %v443
        %468 = vmatprep.subr.bf16.mxu0 0
        %469 = vmatpush1.bf16.msra.mxu0 0
        %470 = vmatprep.subr.bf16.mxu0 0
        %471 = vmatpush1.bf16.msra.mxu0 0
        %472 = vmatprep.subr.bf16.mxu0 0
        %473 = vmatpush1.bf16.msra.mxu0 0
        %474 = vmatprep.subr.bf16.mxu0 0
        %475 = vmatpush1.bf16.msra.mxu0 0
        %476 = vmatprep.subr.bf16.mxu0 0
        %477 = vmatpush1.bf16.msra.mxu0 0
        %478 = vmatprep.subr.bf16.mxu0 0
        %479 = vmatpush1.bf16.msra.mxu0 0
        %480 = vmatprep.subr.bf16.mxu0 0
        %481 = vmatpush1.bf16.msra.mxu0 0
        %482 = vmatprep.subr.bf16.mxu0 0
        %483 = vmatpush1.bf16.msra.mxu0 0
        %484 = vmatprep.mubr.bf16.mxu0 0
        %485 = vmatmul.mubr.bf16.gmra.mrb[0].mxu0 %v396
        %v486 = vpop.f32.mrb[0].mxu0
        %v487 = vadd.f32 0.0, %v486
        %v488 = vpop.f32.mrb[0].mxu0
        %v489 = vpop.f32.mrb[0].mxu0
        %v490 = vadd.f32 0.0, %v489
        %v491 = vpop.f32.mrb[0].mxu0
        %492 = vmatprep.mubr.bf16.mxu0 0
        %493 = vmatmul.mubr.bf16.gmra.mrb[0].mxu0 %v397
        %v494 = vpop.f32.mrb[0].mxu0
        %v495 = vadd.f32 0.0, %v494
        %v496 = vpop.f32.mrb[0].mxu0
        %v497 = vpop.f32.mrb[0].mxu0
        %v498 = vadd.f32 0.0, %v497
        %v499 = vpop.f32.mrb[0].mxu0
        %500 = vmatprep.mubr.bf16.mxu0 0
        %501 = vmatmul.mubr.bf16.gmra.mrb[0].mxu0 %v398
        %v502 = vpop.f32.mrb[0].mxu0
        %v503 = vadd.f32 0.0, %v502
        %v504 = vpop.f32.mrb[0].mxu0
        %v505 = vpop.f32.mrb[0].mxu0
        %v506 = vadd.f32 0.0, %v505
        %v507 = vpop.f32.mrb[0].mxu0
        %508 = vmatprep.mubr.bf16.mxu0 0
        %509 = vmatmul.mubr.bf16.gmra.mrb[0].mxu0 %v399
        %v510 = vpop.f32.mrb[0].mxu0
        %v511 = vadd.f32 0.0, %v510
        %v512 = vpop.f32.mrb[0].mxu0
        %v513 = vpop.f32.mrb[0].mxu0
        %v514 = vpop.f32.mrb[0].mxu0
        %515 = vdwg.mxu0
        %v523 = vunpack.c.l.b16 %v203
        %v524 = vunpack.c.h.b16 %v203
        %v525 = vunpack.c.l.b16 %v207
        %v526 = vunpack.c.h.b16 %v207
        %v527 = vunpack.c.l.b16 %v211
        %v528 = vunpack.c.h.b16 %v211
        %v529 = vunpack.c.l.b16 %v215
        %v530 = vunpack.c.h.b16 %v215
        %v531 = vunpack.c.l.b16 %v219
        %v532 = vunpack.c.h.b16 %v219
        %v533 = vunpack.c.l.b16 %v223
        %v534 = vunpack.c.h.b16 %v223
        %v535 = vunpack.c.l.b16 %v227
        %v536 = vunpack.c.h.b16 %v227
        %v537 = vpack.c.b16 %v525, %v523
        %v538 = vpack.c.b16 %v526, %v524
        %v539 = vpack.c.b16 %v529, %v527
        %v540 = vpack.c.b16 %v530, %v528
        %v541 = vpack.c.b16 %v533, %v531
        %v542 = vpack.c.b16 %v534, %v532
        %v543 = vpack.c.b16 %v535, %v535
        %v544 = vpack.c.b16 %v536, %v536
        %v585 = vunpack.c.l.b16 %v341
        %v586 = vunpack.c.l.b16 %v342
        %v587 = vunpack.c.l.b16 %v343
        %v588 = vunpack.c.l.b16 %v344
        %v589 = vunpack.c.l.b16 %v345
        %v590 = vunpack.c.l.b16 %v346
        %v591 = vunpack.c.l.b16 %v347
        %v592 = vunpack.c.l.b16 %v348
        %v593 = vunpack.c.l.b16 %v349
        %v594 = vunpack.c.l.b16 %v350
        %v595 = vunpack.c.l.b16 %v351
        %v596 = vunpack.c.l.b16 %v352
        %v597 = vunpack.c.l.b16 %v353
        %v598 = vunpack.c.l.b16 %v354
        %v599 = vunpack.c.l.b16 %v355
        %v600 = vunpack.c.l.b16 %v356
        %v601 = vunpack.c.l.b16 %v357
        %v602 = vunpack.c.l.b16 %v358
        %v603 = vunpack.c.l.b16 %v359
        %v604 = vunpack.c.l.b16 %v360
        %v605 = vunpack.c.l.b16 %v361
        %v606 = vunpack.c.l.b16 %v362
        %v607 = vunpack.c.l.b16 %v363
        %v608 = vunpack.c.l.b16 %v364
        %v609 = vunpack.c.l.b16 %v365
        %v610 = vunpack.c.l.b16 %v366
        %v611 = vunpack.c.l.b16 %v367
        %v612 = vunpack.c.l.b16 %v368
        %v613 = vunpack.c.l.b16 %v369
        %v614 = vunpack.c.l.b16 %v370
        %v615 = vunpack.c.l.b16 %v371
        %v616 = vunpack.c.l.b16 %v372
        %v617 = vpack.c.b16 %v586, %v585
        %v618 = vpack.c.b16 %v588, %v587
        %v619 = vpack.c.b16 %v590, %v589
        %v620 = vpack.c.b16 %v592, %v591
        %v621 = vpack.c.b16 %v594, %v593
        %v622 = vpack.c.b16 %v596, %v595
        %v623 = vpack.c.b16 %v598, %v597
        %v624 = vpack.c.b16 %v600, %v599
        %v625 = vpack.c.b16 %v602, %v601
        %v626 = vpack.c.b16 %v604, %v603
        %v627 = vpack.c.b16 %v606, %v605
        %v628 = vpack.c.b16 %v608, %v607
        %v629 = vpack.c.b16 %v610, %v609
        %v630 = vpack.c.b16 %v612, %v611
        %v631 = vpack.c.b16 %v614, %v613
        %v632 = vpack.c.b16 %v616, %v615
        %649 = vmatprep.subr.bf16.mxu0 0
        %650 = vmatpush1.bf16.msra.mxu0 %v617
        %651 = vmatprep.subr.bf16.mxu0 0
        %652 = vmatpush1.bf16.msra.mxu0 %v618
        %653 = vmatprep.subr.bf16.mxu0 0
        %654 = vmatpush1.bf16.msra.mxu0 %v619
        %655 = vmatprep.subr.bf16.mxu0 0
        %656 = vmatpush1.bf16.msra.mxu0 %v620
        %657 = vmatprep.subr.bf16.mxu0 0
        %658 = vmatpush1.bf16.msra.mxu0 %v621
        %659 = vmatprep.subr.bf16.mxu0 0
        %660 = vmatpush1.bf16.msra.mxu0 %v622
        %661 = vmatprep.subr.bf16.mxu0 0
        %662 = vmatpush1.bf16.msra.mxu0 %v623
        %663 = vmatprep.subr.bf16.mxu0 0
        %664 = vmatpush1.bf16.msra.mxu0 %v624
        %665 = vmatprep.subr.bf16.mxu0 0
        %666 = vmatpush1.bf16.msra.mxu0 %v625
        %667 = vmatprep.subr.bf16.mxu0 0
        %668 = vmatpush1.bf16.msra.mxu0 %v626
        %669 = vmatprep.subr.bf16.mxu0 0
        %670 = vmatpush1.bf16.msra.mxu0 %v627
        %671 = vmatprep.subr.bf16.mxu0 0
        %672 = vmatpush1.bf16.msra.mxu0 %v628
        %673 = vmatprep.subr.bf16.mxu0 0
        %674 = vmatpush1.bf16.msra.mxu0 %v629
        %675 = vmatprep.subr.bf16.mxu0 0
        %676 = vmatpush1.bf16.msra.mxu0 %v630
        %677 = vmatprep.subr.bf16.mxu0 0
        %678 = vmatpush1.bf16.msra.mxu0 %v631
        %679 = vmatprep.subr.bf16.mxu0 0
        %680 = vmatpush1.bf16.msra.mxu0 %v632
        %681 = vmatprep.mubr.bf16.mxu0 %v538
        %682 = vmatmul.mubr.bf16.gmra.mrb[0].mxu0 %v537
        %v683 = vpop.f32.mrb[0].mxu0
        %v684 = vadd.f32 %v487, %v683
        %v685 = vpop.f32.mrb[0].mxu0
        %v686 = vpop.f32.mrb[0].mxu0
        %v687 = vadd.f32 %v490, %v686
        %v688 = vpop.f32.mrb[0].mxu0
        %689 = vmatprep.mubr.bf16.mxu0 %v540
        %690 = vmatmul.mubr.bf16.gmra.mrb[0].mxu0 %v539
        %v691 = vpop.f32.mrb[0].mxu0
        %v692 = vadd.f32 %v495, %v691
        %v693 = vpop.f32.mrb[0].mxu0
        %v694 = vpop.f32.mrb[0].mxu0
        %v695 = vadd.f32 %v498, %v694
        %v696 = vpop.f32.mrb[0].mxu0
        %697 = vmatprep.mubr.bf16.mxu0 %v542
        %698 = vmatmul.mubr.bf16.gmra.mrb[0].mxu0 %v541
        %v699 = vpop.f32.mrb[0].mxu0
        %v700 = vadd.f32 %v503, %v699
        %v701 = vpop.f32.mrb[0].mxu0
        %v702 = vpop.f32.mrb[0].mxu0
        %v703 = vadd.f32 %v506, %v702
        %v704 = vpop.f32.mrb[0].mxu0
        %705 = vmatprep.mubr.bf16.mxu0 %v544
        %706 = vmatmul.mubr.bf16.gmra.mrb[0].mxu0 %v543
        %v707 = vpop.f32.mrb[0].mxu0
        %v708 = vadd.f32 %v511, %v707
        %v709 = vpop.f32.mrb[0].mxu0
        %v710 = vpop.f32.mrb[0].mxu0
        %v711 = vpop.f32.mrb[0].mxu0
        %712 = vdwg.mxu0
        %v713 = vunpack.c.l.bf16 %v203
        %v714 = vunpack.c.l.bf16 %v207
        %v715 = vunpack.c.l.bf16 %v211
        %v716 = vunpack.c.l.bf16 %v215
        %v717 = vunpack.c.l.bf16 %v219
        %v718 = vunpack.c.l.bf16 %v223
        %v719 = vunpack.c.l.bf16 %v227
        %v720 = vrot.slane %v203, 4
        %v721 = vrot.slane %v207, 4
        %v722 = vrot.slane %v211, 4
        %v723 = vrot.slane %v215, 4
        %v724 = vrot.slane %v219, 4
        %v725 = vrot.slane %v223, 4
        %v726 = vrot.slane %v227, 4
        %v734 = vunpack.c.l.bf16 %v720
        %v735 = vunpack.c.l.bf16 %v721
        %v736 = vunpack.c.l.bf16 %v722
        %v737 = vunpack.c.l.bf16 %v723
        %v738 = vunpack.c.l.bf16 %v724
        %v739 = vunpack.c.l.bf16 %v725
        %v740 = vunpack.c.l.bf16 %v726
        %v741 = vunpack.c.l.bf16 %v249
        %v742 = vunpack.c.l.bf16 %v263
        %v743 = vunpack.c.l.bf16 %v277
        %v744 = vunpack.c.l.bf16 %v291
        %v745 = vunpack.c.l.bf16 %v305
        %v746 = vunpack.c.l.bf16 %v319
        %v747 = vunpack.c.l.bf16 %v333
        %v748 = vmax.f32 %v713, %v734
        %v749 = vmax.f32 %v714, %v735
        %v750 = vmax.f32 %v715, %v736
        %v751 = vmax.f32 %v716, %v737
        %v752 = vmax.f32 %v717, %v738
        %v753 = vmax.f32 %v718, %v739
        %v754 = vmax.f32 %v719, %v740
        %v755 = vmax.f32 %v748, %v741
        %v756 = vmax.f32 %v749, %v742
        %v757 = vmax.f32 %v750, %v743
        %v758 = vmax.f32 %v751, %v744
        %v759 = vmax.f32 %v752, %v745
        %v760 = vmax.f32 %v753, %v746
        %v761 = vmax.f32 %v754, %v747
        %v763 = vshrl.u32 %v205, 16
        %v765 = vrot.slane %v763, 4
        %v766 = vshll.u32 %v205, 16
        %v768 = vrot.slane %v766, 5
        %v769 = vor.u32 %v765, %v768
        %v770 = vrot.slane %v769, 4
        %v772 = vshll.u32 %v206, 16
        %v774 = vrot.slane %v772, 5
        %v775 = vsel %vm235, %v770, %v774
        %v777 = vshrl.u32 %v209, 16
        %v779 = vrot.slane %v777, 4
        %v780 = vshll.u32 %v209, 16
        %v782 = vrot.slane %v780, 5
        %v783 = vor.u32 %v779, %v782
        %v784 = vrot.slane %v783, 4
        %v786 = vshll.u32 %v210, 16
        %v788 = vrot.slane %v786, 5
        %v789 = vsel %vm235, %v784, %v788
        %v791 = vshrl.u32 %v213, 16
        %v793 = vrot.slane %v791, 4
        %v794 = vshll.u32 %v213, 16
        %v796 = vrot.slane %v794, 5
        %v797 = vor.u32 %v793, %v796
        %v798 = vrot.slane %v797, 4
        %v800 = vshll.u32 %v214, 16
        %v802 = vrot.slane %v800, 5
        %v803 = vsel %vm235, %v798, %v802
        %v805 = vshrl.u32 %v217, 16
        %v807 = vrot.slane %v805, 4
        %v808 = vshll.u32 %v217, 16
        %v810 = vrot.slane %v808, 5
        %v811 = vor.u32 %v807, %v810
        %v812 = vrot.slane %v811, 4
        %v814 = vshll.u32 %v218, 16
        %v816 = vrot.slane %v814, 5
        %v817 = vsel %vm235, %v812, %v816
        %v819 = vshrl.u32 %v221, 16
        %v821 = vrot.slane %v819, 4
        %v822 = vshll.u32 %v221, 16
        %v824 = vrot.slane %v822, 5
        %v825 = vor.u32 %v821, %v824
        %v826 = vrot.slane %v825, 4
        %v828 = vshll.u32 %v222, 16
        %v830 = vrot.slane %v828, 5
        %v831 = vsel %vm235, %v826, %v830
        %v833 = vshrl.u32 %v225, 16
        %v835 = vrot.slane %v833, 4
        %v836 = vshll.u32 %v225, 16
        %v838 = vrot.slane %v836, 5
        %v839 = vor.u32 %v835, %v838
        %v840 = vrot.slane %v839, 4
        %v842 = vshll.u32 %v226, 16
        %v844 = vrot.slane %v842, 5
        %v845 = vsel %vm235, %v840, %v844
        %v847 = vshrl.u32 %v229, 16
        %v849 = vrot.slane %v847, 4
        %v850 = vshll.u32 %v229, 16
        %v852 = vrot.slane %v850, 5
        %v853 = vor.u32 %v849, %v852
        %v854 = vrot.slane %v853, 4
        %v856 = vshll.u32 %v230, 16
        %v858 = vrot.slane %v856, 5
        %v859 = vsel %vm235, %v854, %v858
        %s867 = scalar_lea.vmem %s1, 128
        %v868 = vld [vmem:[%s867] sm:$0xf]
        %v869 = vld [vmem:[%s867 + $0x4] sm:$0xf]
        %v870 = vld [vmem:[%s867 + $0x8] sm:$0xf]
        %v871 = vld [vmem:[%s867 + $0xc] sm:$0xf]
        %v872 = vld [vmem:[%s867 + $0x10] sm:$0xf]
        %v873 = vld [vmem:[%s867 + $0x14] sm:$0xf]
        %v874 = vld [vmem:[%s867 + $0x18] sm:$0xf]
        %v875 = vld [vmem:[%s867 + $0x1c] sm:$0xf]
        %v876 = vld [vmem:[%s867 + $0x20] sm:$0xf]
        %v877 = vld [vmem:[%s867 + $0x24] sm:$0xf]
        %v878 = vld [vmem:[%s867 + $0x28] sm:$0xf]
        %v879 = vld [vmem:[%s867 + $0x2c] sm:$0xf]
        %v880 = vld [vmem:[%s867 + $0x30] sm:$0xf]
        %v881 = vld [vmem:[%s867 + $0x34] sm:$0xf]
        %v882 = vld [vmem:[%s867 + $0x38] sm:$0xf]
        %v883 = vld [vmem:[%s867 + $0x3c] sm:$0xf]
        %v884 = vld [vmem:[%s867 + $0x40] sm:$0xf]
        %v885 = vld [vmem:[%s867 + $0x44] sm:$0xf]
        %v886 = vld [vmem:[%s867 + $0x48] sm:$0xf]
        %v887 = vld [vmem:[%s867 + $0x4c] sm:$0xf]
        %v888 = vld [vmem:[%s867 + $0x50] sm:$0xf]
        %v889 = vld [vmem:[%s867 + $0x54] sm:$0xf]
        %v890 = vld [vmem:[%s867 + $0x58] sm:$0xf]
        %v891 = vld [vmem:[%s867 + $0x5c] sm:$0xf]
        %v892 = vld [vmem:[%s867 + $0x60] sm:$0xf]
        %v893 = vld [vmem:[%s867 + $0x64] sm:$0xf]
        %v894 = vld [vmem:[%s867 + $0x68] sm:$0xf]
        %v895 = vld [vmem:[%s867 + $0x6c] sm:$0xf]
        %v896 = vld [vmem:[%s867 + $0x70] sm:$0xf]
        %v897 = vld [vmem:[%s867 + $0x74] sm:$0xf]
        %v898 = vld [vmem:[%s867 + $0x78] sm:$0xf]
        %v899 = vld [vmem:[%s867 + $0x7c] sm:$0xf]
        %v907 = vunpack.c.l.b16 %v205
        %v908 = vunpack.c.h.b16 %v205
        %v909 = vunpack.c.l.b16 %v209
        %v910 = vunpack.c.h.b16 %v209
        %v911 = vunpack.c.l.b16 %v213
        %v912 = vunpack.c.h.b16 %v213
        %v913 = vunpack.c.l.b16 %v217
        %v914 = vunpack.c.h.b16 %v217
        %v915 = vunpack.c.l.b16 %v221
        %v916 = vunpack.c.h.b16 %v221
        %v917 = vunpack.c.l.b16 %v225
        %v918 = vunpack.c.h.b16 %v225
        %v919 = vunpack.c.l.b16 %v229
        %v920 = vunpack.c.h.b16 %v229
        %v921 = vpack.c.b16 %v909, %v907
        %v922 = vpack.c.b16 %v910, %v908
        %v923 = vpack.c.b16 %v913, %v911
        %v924 = vpack.c.b16 %v914, %v912
        %v925 = vpack.c.b16 %v917, %v915
        %v926 = vpack.c.b16 %v918, %v916
        %v927 = vpack.c.b16 %v919, %v919
        %v928 = vpack.c.b16 %v920, %v920
        %v969 = vunpack.c.l.b16 %v868
        %v970 = vunpack.c.l.b16 %v869
        %v971 = vunpack.c.l.b16 %v870
        %v972 = vunpack.c.l.b16 %v871
        %v973 = vunpack.c.l.b16 %v872
        %v974 = vunpack.c.l.b16 %v873
        %v975 = vunpack.c.l.b16 %v874
        %v976 = vunpack.c.l.b16 %v875
        %v977 = vunpack.c.l.b16 %v876
        %v978 = vunpack.c.l.b16 %v877
        %v979 = vunpack.c.l.b16 %v878
        %v980 = vunpack.c.l.b16 %v879
        %v981 = vunpack.c.l.b16 %v880
        %v982 = vunpack.c.l.b16 %v881
        %v983 = vunpack.c.l.b16 %v882
        %v984 = vunpack.c.l.b16 %v883
        %v985 = vunpack.c.l.b16 %v884
        %v986 = vunpack.c.l.b16 %v885
        %v987 = vunpack.c.l.b16 %v886
        %v988 = vunpack.c.l.b16 %v887
        %v989 = vunpack.c.l.b16 %v888
        %v990 = vunpack.c.l.b16 %v889
        %v991 = vunpack.c.l.b16 %v890
        %v992 = vunpack.c.l.b16 %v891
        %v993 = vunpack.c.l.b16 %v892
        %v994 = vunpack.c.l.b16 %v893
        %v995 = vunpack.c.l.b16 %v894
        %v996 = vunpack.c.l.b16 %v895
        %v997 = vunpack.c.l.b16 %v896
        %v998 = vunpack.c.l.b16 %v897
        %v999 = vunpack.c.l.b16 %v898
        %v1000 = vunpack.c.l.b16 %v899
        %v1001 = vpack.c.b16 %v970, %v969
        %v1002 = vpack.c.b16 %v972, %v971
        %v1003 = vpack.c.b16 %v974, %v973
        %v1004 = vpack.c.b16 %v976, %v975
        %v1005 = vpack.c.b16 %v978, %v977
        %v1006 = vpack.c.b16 %v980, %v979
        %v1007 = vpack.c.b16 %v982, %v981
        %v1008 = vpack.c.b16 %v984, %v983
        %v1009 = vpack.c.b16 %v986, %v985
        %v1010 = vpack.c.b16 %v988, %v987
        %v1011 = vpack.c.b16 %v990, %v989
        %v1012 = vpack.c.b16 %v992, %v991
        %v1013 = vpack.c.b16 %v994, %v993
        %v1014 = vpack.c.b16 %v996, %v995
        %v1015 = vpack.c.b16 %v998, %v997
        %v1016 = vpack.c.b16 %v1000, %v999
        %1033 = vmatprep.subr.bf16.mxu0 0
        %1034 = vmatpush1.bf16.msra.mxu0 %v1001
        %1035 = vmatprep.subr.bf16.mxu0 0
        %1036 = vmatpush1.bf16.msra.mxu0 %v1002
        %1037 = vmatprep.subr.bf16.mxu0 0
        %1038 = vmatpush1.bf16.msra.mxu0 %v1003
        %1039 = vmatprep.subr.bf16.mxu0 0
        %1040 = vmatpush1.bf16.msra.mxu0 %v1004
        %1041 = vmatprep.subr.bf16.mxu0 0
        %1042 = vmatpush1.bf16.msra.mxu0 %v1005
        %1043 = vmatprep.subr.bf16.mxu0 0
        %1044 = vmatpush1.bf16.msra.mxu0 %v1006
        %1045 = vmatprep.subr.bf16.mxu0 0
        %1046 = vmatpush1.bf16.msra.mxu0 %v1007
        %1047 = vmatprep.subr.bf16.mxu0 0
        %1048 = vmatpush1.bf16.msra.mxu0 %v1008
        %1049 = vmatprep.subr.bf16.mxu0 0
        %1050 = vmatpush1.bf16.msra.mxu0 %v1009
        %1051 = vmatprep.subr.bf16.mxu0 0
        %1052 = vmatpush1.bf16.msra.mxu0 %v1010
        %1053 = vmatprep.subr.bf16.mxu0 0
        %1054 = vmatpush1.bf16.msra.mxu0 %v1011
        %1055 = vmatprep.subr.bf16.mxu0 0
        %1056 = vmatpush1.bf16.msra.mxu0 %v1012
        %1057 = vmatprep.subr.bf16.mxu0 0
        %1058 = vmatpush1.bf16.msra.mxu0 %v1013
        %1059 = vmatprep.subr.bf16.mxu0 0
        %1060 = vmatpush1.bf16.msra.mxu0 %v1014
        %1061 = vmatprep.subr.bf16.mxu0 0
        %1062 = vmatpush1.bf16.msra.mxu0 %v1015
        %1063 = vmatprep.subr.bf16.mxu0 0
        %1064 = vmatpush1.bf16.msra.mxu0 %v1016
        %1065 = vmatprep.mubr.bf16.mxu0 %v922
        %1066 = vmatmul.mubr.bf16.gmra.mrb[0].mxu0 %v921
        %v1067 = vpop.f32.mrb[0].mxu0
        %v1068 = vadd.f32 0.0, %v1067
        %v1069 = vpop.f32.mrb[0].mxu0
        %v1070 = vpop.f32.mrb[0].mxu0
        %v1071 = vadd.f32 0.0, %v1070
        %v1072 = vpop.f32.mrb[0].mxu0
        %1073 = vmatprep.mubr.bf16.mxu0 %v924
        %1074 = vmatmul.mubr.bf16.gmra.mrb[0].mxu0 %v923
        %v1075 = vpop.f32.mrb[0].mxu0
        %v1076 = vadd.f32 0.0, %v1075
        %v1077 = vpop.f32.mrb[0].mxu0
        %v1078 = vpop.f32.mrb[0].mxu0
        %v1079 = vadd.f32 0.0, %v1078
        %v1080 = vpop.f32.mrb[0].mxu0
        %1081 = vmatprep.mubr.bf16.mxu0 %v926
        %1082 = vmatmul.mubr.bf16.gmra.mrb[0].mxu0 %v925
        %v1083 = vpop.f32.mrb[0].mxu0
        %v1084 = vadd.f32 0.0, %v1083
        %v1085 = vpop.f32.mrb[0].mxu0
        %v1086 = vpop.f32.mrb[0].mxu0
        %v1087 = vadd.f32 0.0, %v1086
        %v1088 = vpop.f32.mrb[0].mxu0
        %1089 = vmatprep.mubr.bf16.mxu0 %v928
        %1090 = vmatmul.mubr.bf16.gmra.mrb[0].mxu0 %v927
        %v1091 = vpop.f32.mrb[0].mxu0
        %v1092 = vadd.f32 0.0, %v1091
        %v1093 = vpop.f32.mrb[0].mxu0
        %v1094 = vpop.f32.mrb[0].mxu0
        %v1095 = vpop.f32.mrb[0].mxu0
        %1096 = vdwg.mxu0
        %v1097 = vadd.f32 %v684, %v1068
        %v1098 = vadd.f32 %v687, %v1071
        %v1099 = vadd.f32 %v692, %v1076
        %v1100 = vadd.f32 %v695, %v1079
        %v1101 = vadd.f32 %v700, %v1084
        %v1102 = vadd.f32 %v703, %v1087
        %v1103 = vadd.f32 %v708, %v1092
        %s1104 = scalar_lea.vmem %s2, 64
        %v1105 = vld [vmem:[%s1104] sm:$0xf]
        %v1106 = vld [vmem:[%s1104 + $0x4] sm:$0xf]
        %v1107 = vld [vmem:[%s1104 + $0x8] sm:$0xf]
        %v1108 = vld [vmem:[%s1104 + $0xc] sm:$0xf]
        %v1109 = vld [vmem:[%s1104 + $0x10] sm:$0xf]
        %v1110 = vld [vmem:[%s1104 + $0x14] sm:$0xf]
        %v1111 = vld [vmem:[%s1104 + $0x18] sm:$0xf]
        %v1112 = vld [vmem:[%s1104 + $0x1c] sm:$0xf]
        %v1113 = vld [vmem:[%s1104 + $0x20] sm:$0xf]
        %v1114 = vld [vmem:[%s1104 + $0x24] sm:$0xf]
        %v1115 = vld [vmem:[%s1104 + $0x28] sm:$0xf]
        %v1116 = vld [vmem:[%s1104 + $0x2c] sm:$0xf]
        %v1117 = vld [vmem:[%s1104 + $0x30] sm:$0xf]
        %v1118 = vld [vmem:[%s1104 + $0x34] sm:$0xf]
        %v1119 = vld [vmem:[%s1104 + $0x38] sm:$0xf]
        %v1120 = vld [vmem:[%s1104 + $0x3c] sm:$0xf]
        %v1121 = vunpack.c.l.b16 %v775
        %v1122 = vunpack.c.l.b16 %v789
        %v1123 = vunpack.c.l.b16 %v803
        %v1124 = vunpack.c.l.b16 %v817
        %v1125 = vunpack.c.l.b16 %v831
        %v1126 = vunpack.c.l.b16 %v845
        %v1127 = vunpack.c.l.b16 %v859
        %v1128 = vpack.c.b16 %v1122, %v1121
        %v1129 = vpack.c.b16 %v1124, %v1123
        %v1130 = vpack.c.b16 %v1126, %v1125
        %v1131 = vpack.c.b16 %v1127, %v1127
        %v1152 = vunpack.c.l.b16 %v1105
        %v1153 = vunpack.c.l.b16 %v1106
        %v1154 = vunpack.c.l.b16 %v1107
        %v1155 = vunpack.c.l.b16 %v1108
        %v1156 = vunpack.c.l.b16 %v1109
        %v1157 = vunpack.c.l.b16 %v1110
        %v1158 = vunpack.c.l.b16 %v1111
        %v1159 = vunpack.c.l.b16 %v1112
        %v1160 = vunpack.c.l.b16 %v1113
        %v1161 = vunpack.c.l.b16 %v1114
        %v1162 = vunpack.c.l.b16 %v1115
        %v1163 = vunpack.c.l.b16 %v1116
        %v1164 = vunpack.c.l.b16 %v1117
        %v1165 = vunpack.c.l.b16 %v1118
        %v1166 = vunpack.c.l.b16 %v1119
        %v1167 = vunpack.c.l.b16 %v1120
        %v1168 = vpack.c.b16 %v1153, %v1152
        %v1169 = vpack.c.b16 %v1155, %v1154
        %v1170 = vpack.c.b16 %v1157, %v1156
        %v1171 = vpack.c.b16 %v1159, %v1158
        %v1172 = vpack.c.b16 %v1161, %v1160
        %v1173 = vpack.c.b16 %v1163, %v1162
        %v1174 = vpack.c.b16 %v1165, %v1164
        %v1175 = vpack.c.b16 %v1167, %v1166
        %1184 = vmatprep.subr.bf16.mxu0 0
        %1185 = vmatpush1.bf16.msra.mxu0 %v1168
        %1186 = vmatprep.subr.bf16.mxu0 0
        %1187 = vmatpush1.bf16.msra.mxu0 %v1169
        %1188 = vmatprep.subr.bf16.mxu0 0
        %1189 = vmatpush1.bf16.msra.mxu0 %v1170
        %1190 = vmatprep.subr.bf16.mxu0 0
        %1191 = vmatpush1.bf16.msra.mxu0 %v1171
        %1192 = vmatprep.subr.bf16.mxu0 0
        %1193 = vmatpush1.bf16.msra.mxu0 %v1172
        %1194 = vmatprep.subr.bf16.mxu0 0
        %1195 = vmatpush1.bf16.msra.mxu0 %v1173
        %1196 = vmatprep.subr.bf16.mxu0 0
        %1197 = vmatpush1.bf16.msra.mxu0 %v1174
        %1198 = vmatprep.subr.bf16.mxu0 0
        %1199 = vmatpush1.bf16.msra.mxu0 %v1175
        %1200 = vmatprep.subr.bf16.mxu0 0
        %1201 = vmatpush1.bf16.msra.mxu0 0
        %1202 = vmatprep.subr.bf16.mxu0 0
        %1203 = vmatpush1.bf16.msra.mxu0 0
        %1204 = vmatprep.subr.bf16.mxu0 0
        %1205 = vmatpush1.bf16.msra.mxu0 0
        %1206 = vmatprep.subr.bf16.mxu0 0
        %1207 = vmatpush1.bf16.msra.mxu0 0
        %1208 = vmatprep.subr.bf16.mxu0 0
        %1209 = vmatpush1.bf16.msra.mxu0 0
        %1210 = vmatprep.subr.bf16.mxu0 0
        %1211 = vmatpush1.bf16.msra.mxu0 0
        %1212 = vmatprep.subr.bf16.mxu0 0
        %1213 = vmatpush1.bf16.msra.mxu0 0
        %1214 = vmatprep.subr.bf16.mxu0 0
        %1215 = vmatpush1.bf16.msra.mxu0 0
        %1216 = vmatprep.mubr.bf16.mxu0 0
        %1217 = vmatmul.mubr.bf16.gmra.mrb[0].mxu0 %v1128
        %v1218 = vpop.f32.mrb[0].mxu0
        %v1219 = vadd.f32 0.0, %v1218
        %v1220 = vpop.f32.mrb[0].mxu0
        %v1221 = vpop.f32.mrb[0].mxu0
        %v1222 = vadd.f32 0.0, %v1221
        %v1223 = vpop.f32.mrb[0].mxu0
        %1224 = vmatprep.mubr.bf16.mxu0 0
        %1225 = vmatmul.mubr.bf16.gmra.mrb[0].mxu0 %v1129
        %v1226 = vpop.f32.mrb[0].mxu0
        %v1227 = vadd.f32 0.0, %v1226
        %v1228 = vpop.f32.mrb[0].mxu0
        %v1229 = vpop.f32.mrb[0].mxu0
        %v1230 = vadd.f32 0.0, %v1229
        %v1231 = vpop.f32.mrb[0].mxu0
        %1232 = vmatprep.mubr.bf16.mxu0 0
        %1233 = vmatmul.mubr.bf16.gmra.mrb[0].mxu0 %v1130
        %v1234 = vpop.f32.mrb[0].mxu0
        %v1235 = vadd.f32 0.0, %v1234
        %v1236 = vpop.f32.mrb[0].mxu0
        %v1237 = vpop.f32.mrb[0].mxu0
        %v1238 = vadd.f32 0.0, %v1237
        %v1239 = vpop.f32.mrb[0].mxu0
        %1240 = vmatprep.mubr.bf16.mxu0 0
        %1241 = vmatmul.mubr.bf16.gmra.mrb[0].mxu0 %v1131
        %v1242 = vpop.f32.mrb[0].mxu0
        %v1243 = vadd.f32 0.0, %v1242
        %v1244 = vpop.f32.mrb[0].mxu0
        %v1245 = vpop.f32.mrb[0].mxu0
        %v1246 = vpop.f32.mrb[0].mxu0
        %1247 = vdwg.mxu0
        %v1248 = vadd.f32 %v1097, %v1219
        %v1249 = vadd.f32 %v1098, %v1222
        %v1250 = vadd.f32 %v1099, %v1227
        %v1251 = vadd.f32 %v1100, %v1230
        %v1252 = vadd.f32 %v1101, %v1235
        %v1253 = vadd.f32 %v1102, %v1238
        %v1254 = vadd.f32 %v1103, %v1243
        %v1255 = vunpack.c.l.bf16 %v205
        %v1256 = vunpack.c.l.bf16 %v209
        %v1257 = vunpack.c.l.bf16 %v213
        %v1258 = vunpack.c.l.bf16 %v217
        %v1259 = vunpack.c.l.bf16 %v221
        %v1260 = vunpack.c.l.bf16 %v225
        %v1261 = vunpack.c.l.bf16 %v229
        %v1262 = vrot.slane %v205, 4
        %v1263 = vrot.slane %v209, 4
        %v1264 = vrot.slane %v213, 4
        %v1265 = vrot.slane %v217, 4
        %v1266 = vrot.slane %v221, 4
        %v1267 = vrot.slane %v225, 4
        %v1268 = vrot.slane %v229, 4
        %v1276 = vunpack.c.l.bf16 %v1262
        %v1277 = vunpack.c.l.bf16 %v1263
        %v1278 = vunpack.c.l.bf16 %v1264
        %v1279 = vunpack.c.l.bf16 %v1265
        %v1280 = vunpack.c.l.bf16 %v1266
        %v1281 = vunpack.c.l.bf16 %v1267
        %v1282 = vunpack.c.l.bf16 %v1268
        %v1283 = vunpack.c.l.bf16 %v775
        %v1284 = vunpack.c.l.bf16 %v789
        %v1285 = vunpack.c.l.bf16 %v803
        %v1286 = vunpack.c.l.bf16 %v817
        %v1287 = vunpack.c.l.bf16 %v831
        %v1288 = vunpack.c.l.bf16 %v845
        %v1289 = vunpack.c.l.bf16 %v859
        %v1290 = vmax.f32 %v1255, %v1276
        %v1291 = vmax.f32 %v1256, %v1277
        %v1292 = vmax.f32 %v1257, %v1278
        %v1293 = vmax.f32 %v1258, %v1279
        %v1294 = vmax.f32 %v1259, %v1280
        %v1295 = vmax.f32 %v1260, %v1281
        %v1296 = vmax.f32 %v1261, %v1282
        %v1297 = vmax.f32 %v1290, %v1283
        %v1298 = vmax.f32 %v1291, %v1284
        %v1299 = vmax.f32 %v1292, %v1285
        %v1300 = vmax.f32 %v1293, %v1286
        %v1301 = vmax.f32 %v1294, %v1287
        %v1302 = vmax.f32 %v1295, %v1288
        %v1303 = vmax.f32 %v1296, %v1289
        %v1304 = vmax.f32 %v755, %v1297
        %v1305 = vmax.f32 %v756, %v1298
        %v1306 = vmax.f32 %v757, %v1299
        %v1307 = vmax.f32 %v758, %v1300
        %v1308 = vmax.f32 %v759, %v1301
        %v1309 = vmax.f32 %v760, %v1302
        %v1310 = vmax.f32 %v761, %v1303
        %v1312 = vshrl.u32 %v231, 16
        %v1314 = vrot.slane %v1312, 4
        %v1315 = vshll.u32 %v231, 16
        %v1317 = vrot.slane %v1315, 5
        %v1318 = vor.u32 %v1314, %v1317
        %v1319 = vrot.slane %v1318, 4
        %v1321 = vshll.u32 %v232, 16
        %v1323 = vrot.slane %v1321, 5
        %v1324 = vsel %vm235, %v1319, %v1323
        %s1326 = scalar_lea.vmem %s1, 256
        %v1327 = vld [vmem:[%s1326] sm:$0xf]
        %v1328 = vld [vmem:[%s1326 + $0x4] sm:$0xf]
        %v1329 = vld [vmem:[%s1326 + $0x8] sm:$0xf]
        %v1330 = vld [vmem:[%s1326 + $0xc] sm:$0xf]
        %v1331 = vld [vmem:[%s1326 + $0x10] sm:$0xf]
        %v1332 = vld [vmem:[%s1326 + $0x14] sm:$0xf]
        %v1333 = vld [vmem:[%s1326 + $0x18] sm:$0xf]
        %v1334 = vld [vmem:[%s1326 + $0x1c] sm:$0xf]
        %v1335 = vld [vmem:[%s1326 + $0x20] sm:$0xf]
        %v1336 = vld [vmem:[%s1326 + $0x24] sm:$0xf]
        %v1337 = vld [vmem:[%s1326 + $0x28] sm:$0xf]
        %v1338 = vld [vmem:[%s1326 + $0x2c] sm:$0xf]
        %v1339 = vld [vmem:[%s1326 + $0x30] sm:$0xf]
        %v1340 = vld [vmem:[%s1326 + $0x34] sm:$0xf]
        %v1341 = vld [vmem:[%s1326 + $0x38] sm:$0xf]
        %v1342 = vld [vmem:[%s1326 + $0x3c] sm:$0xf]
        %v1343 = vld [vmem:[%s1326 + $0x40] sm:$0xf]
        %v1344 = vld [vmem:[%s1326 + $0x44] sm:$0xf]
        %v1345 = vld [vmem:[%s1326 + $0x48] sm:$0xf]
        %v1346 = vld [vmem:[%s1326 + $0x4c] sm:$0xf]
        %v1347 = vld [vmem:[%s1326 + $0x50] sm:$0xf]
        %v1348 = vld [vmem:[%s1326 + $0x54] sm:$0xf]
        %v1349 = vld [vmem:[%s1326 + $0x58] sm:$0xf]
        %v1350 = vld [vmem:[%s1326 + $0x5c] sm:$0xf]
        %v1351 = vld [vmem:[%s1326 + $0x60] sm:$0xf]
        %v1352 = vld [vmem:[%s1326 + $0x64] sm:$0xf]
        %v1353 = vld [vmem:[%s1326 + $0x68] sm:$0xf]
        %v1354 = vld [vmem:[%s1326 + $0x6c] sm:$0xf]
        %v1355 = vld [vmem:[%s1326 + $0x70] sm:$0xf]
        %v1356 = vld [vmem:[%s1326 + $0x74] sm:$0xf]
        %v1357 = vld [vmem:[%s1326 + $0x78] sm:$0xf]
        %v1358 = vld [vmem:[%s1326 + $0x7c] sm:$0xf]
        %v1360 = vunpack.c.l.b16 %v231
        %v1361 = vunpack.c.h.b16 %v231
        %v1362 = vpack.c.b16 %v527, %v525
        %v1363 = vpack.c.b16 %v528, %v526
        %v1364 = vpack.c.b16 %v531, %v529
        %v1365 = vpack.c.b16 %v532, %v530
        %v1366 = vpack.c.b16 %v535, %v533
        %v1367 = vpack.c.b16 %v536, %v534
        %v1368 = vpack.c.b16 %v1360, %v1360
        %v1369 = vpack.c.b16 %v1361, %v1361
        %v1410 = vunpack.c.l.b16 %v1327
        %v1411 = vunpack.c.l.b16 %v1328
        %v1412 = vunpack.c.l.b16 %v1329
        %v1413 = vunpack.c.l.b16 %v1330
        %v1414 = vunpack.c.l.b16 %v1331
        %v1415 = vunpack.c.l.b16 %v1332
        %v1416 = vunpack.c.l.b16 %v1333
        %v1417 = vunpack.c.l.b16 %v1334
        %v1418 = vunpack.c.l.b16 %v1335
        %v1419 = vunpack.c.l.b16 %v1336
        %v1420 = vunpack.c.l.b16 %v1337
        %v1421 = vunpack.c.l.b16 %v1338
        %v1422 = vunpack.c.l.b16 %v1339
        %v1423 = vunpack.c.l.b16 %v1340
        %v1424 = vunpack.c.l.b16 %v1341
        %v1425 = vunpack.c.l.b16 %v1342
        %v1426 = vunpack.c.l.b16 %v1343
        %v1427 = vunpack.c.l.b16 %v1344
        %v1428 = vunpack.c.l.b16 %v1345
        %v1429 = vunpack.c.l.b16 %v1346
        %v1430 = vunpack.c.l.b16 %v1347
        %v1431 = vunpack.c.l.b16 %v1348
        %v1432 = vunpack.c.l.b16 %v1349
        %v1433 = vunpack.c.l.b16 %v1350
        %v1434 = vunpack.c.l.b16 %v1351
        %v1435 = vunpack.c.l.b16 %v1352
        %v1436 = vunpack.c.l.b16 %v1353
        %v1437 = vunpack.c.l.b16 %v1354
        %v1438 = vunpack.c.l.b16 %v1355
        %v1439 = vunpack.c.l.b16 %v1356
        %v1440 = vunpack.c.l.b16 %v1357
        %v1441 = vunpack.c.l.b16 %v1358
        %v1442 = vpack.c.b16 %v1411, %v1410
        %v1443 = vpack.c.b16 %v1413, %v1412
        %v1444 = vpack.c.b16 %v1415, %v1414
        %v1445 = vpack.c.b16 %v1417, %v1416
        %v1446 = vpack.c.b16 %v1419, %v1418
        %v1447 = vpack.c.b16 %v1421, %v1420
        %v1448 = vpack.c.b16 %v1423, %v1422
        %v1449 = vpack.c.b16 %v1425, %v1424
        %v1450 = vpack.c.b16 %v1427, %v1426
        %v1451 = vpack.c.b16 %v1429, %v1428
        %v1452 = vpack.c.b16 %v1431, %v1430
        %v1453 = vpack.c.b16 %v1433, %v1432
        %v1454 = vpack.c.b16 %v1435, %v1434
        %v1455 = vpack.c.b16 %v1437, %v1436
        %v1456 = vpack.c.b16 %v1439, %v1438
        %v1457 = vpack.c.b16 %v1441, %v1440
        %1474 = vmatprep.subr.bf16.mxu0 0
        %1475 = vmatpush1.bf16.msra.mxu0 %v1442
        %1476 = vmatprep.subr.bf16.mxu0 0
        %1477 = vmatpush1.bf16.msra.mxu0 %v1443
        %1478 = vmatprep.subr.bf16.mxu0 0
        %1479 = vmatpush1.bf16.msra.mxu0 %v1444
        %1480 = vmatprep.subr.bf16.mxu0 0
        %1481 = vmatpush1.bf16.msra.mxu0 %v1445
        %1482 = vmatprep.subr.bf16.mxu0 0
        %1483 = vmatpush1.bf16.msra.mxu0 %v1446
        %1484 = vmatprep.subr.bf16.mxu0 0
        %1485 = vmatpush1.bf16.msra.mxu0 %v1447
        %1486 = vmatprep.subr.bf16.mxu0 0
        %1487 = vmatpush1.bf16.msra.mxu0 %v1448
        %1488 = vmatprep.subr.bf16.mxu0 0
        %1489 = vmatpush1.bf16.msra.mxu0 %v1449
        %1490 = vmatprep.subr.bf16.mxu0 0
        %1491 = vmatpush1.bf16.msra.mxu0 %v1450
        %1492 = vmatprep.subr.bf16.mxu0 0
        %1493 = vmatpush1.bf16.msra.mxu0 %v1451
        %1494 = vmatprep.subr.bf16.mxu0 0
        %1495 = vmatpush1.bf16.msra.mxu0 %v1452
        %1496 = vmatprep.subr.bf16.mxu0 0
        %1497 = vmatpush1.bf16.msra.mxu0 %v1453
        %1498 = vmatprep.subr.bf16.mxu0 0
        %1499 = vmatpush1.bf16.msra.mxu0 %v1454
        %1500 = vmatprep.subr.bf16.mxu0 0
        %1501 = vmatpush1.bf16.msra.mxu0 %v1455
        %1502 = vmatprep.subr.bf16.mxu0 0
        %1503 = vmatpush1.bf16.msra.mxu0 %v1456
        %1504 = vmatprep.subr.bf16.mxu0 0
        %1505 = vmatpush1.bf16.msra.mxu0 %v1457
        %1506 = vmatprep.mubr.bf16.mxu0 %v1363
        %1507 = vmatmul.mubr.bf16.gmra.mrb[0].mxu0 %v1362
        %v1508 = vpop.f32.mrb[0].mxu0
        %v1509 = vadd.f32 0.0, %v1508
        %v1510 = vpop.f32.mrb[0].mxu0
        %v1511 = vpop.f32.mrb[0].mxu0
        %v1512 = vadd.f32 0.0, %v1511
        %v1513 = vpop.f32.mrb[0].mxu0
        %1514 = vmatprep.mubr.bf16.mxu0 %v1365
        %1515 = vmatmul.mubr.bf16.gmra.mrb[0].mxu0 %v1364
        %v1516 = vpop.f32.mrb[0].mxu0
        %v1517 = vadd.f32 0.0, %v1516
        %v1518 = vpop.f32.mrb[0].mxu0
        %v1519 = vpop.f32.mrb[0].mxu0
        %v1520 = vadd.f32 0.0, %v1519
        %v1521 = vpop.f32.mrb[0].mxu0
        %1522 = vmatprep.mubr.bf16.mxu0 %v1367
        %1523 = vmatmul.mubr.bf16.gmra.mrb[0].mxu0 %v1366
        %v1524 = vpop.f32.mrb[0].mxu0
        %v1525 = vadd.f32 0.0, %v1524
        %v1526 = vpop.f32.mrb[0].mxu0
        %v1527 = vpop.f32.mrb[0].mxu0
        %v1528 = vadd.f32 0.0, %v1527
        %v1529 = vpop.f32.mrb[0].mxu0
        %1530 = vmatprep.mubr.bf16.mxu0 %v1369
        %1531 = vmatmul.mubr.bf16.gmra.mrb[0].mxu0 %v1368
        %v1532 = vpop.f32.mrb[0].mxu0
        %v1533 = vadd.f32 0.0, %v1532
        %v1534 = vpop.f32.mrb[0].mxu0
        %v1535 = vpop.f32.mrb[0].mxu0
        %v1536 = vpop.f32.mrb[0].mxu0
        %1537 = vdwg.mxu0
        %v1538 = vadd.f32 %v1248, %v1509
        %v1539 = vadd.f32 %v1249, %v1512
        %v1540 = vadd.f32 %v1250, %v1517
        %v1541 = vadd.f32 %v1251, %v1520
        %v1542 = vadd.f32 %v1252, %v1525
        %v1543 = vadd.f32 %v1253, %v1528
        %v1544 = vadd.f32 %v1254, %v1533
        %s1545 = scalar_lea.vmem %s2, 128
        %v1546 = vld [vmem:[%s1545] sm:$0xf]
        %v1547 = vld [vmem:[%s1545 + $0x4] sm:$0xf]
        %v1548 = vld [vmem:[%s1545 + $0x8] sm:$0xf]
        %v1549 = vld [vmem:[%s1545 + $0xc] sm:$0xf]
        %v1550 = vld [vmem:[%s1545 + $0x10] sm:$0xf]
        %v1551 = vld [vmem:[%s1545 + $0x14] sm:$0xf]
        %v1552 = vld [vmem:[%s1545 + $0x18] sm:$0xf]
        %v1553 = vld [vmem:[%s1545 + $0x1c] sm:$0xf]
        %v1554 = vld [vmem:[%s1545 + $0x20] sm:$0xf]
        %v1555 = vld [vmem:[%s1545 + $0x24] sm:$0xf]
        %v1556 = vld [vmem:[%s1545 + $0x28] sm:$0xf]
        %v1557 = vld [vmem:[%s1545 + $0x2c] sm:$0xf]
        %v1558 = vld [vmem:[%s1545 + $0x30] sm:$0xf]
        %v1559 = vld [vmem:[%s1545 + $0x34] sm:$0xf]
        %v1560 = vld [vmem:[%s1545 + $0x38] sm:$0xf]
        %v1561 = vld [vmem:[%s1545 + $0x3c] sm:$0xf]
        %v1562 = vunpack.c.l.b16 %v1324
        %v1563 = vpack.c.b16 %v391, %v390
        %v1564 = vpack.c.b16 %v393, %v392
        %v1565 = vpack.c.b16 %v395, %v394
        %v1566 = vpack.c.b16 %v1562, %v1562
        %v1587 = vunpack.c.l.b16 %v1546
        %v1588 = vunpack.c.l.b16 %v1547
        %v1589 = vunpack.c.l.b16 %v1548
        %v1590 = vunpack.c.l.b16 %v1549
        %v1591 = vunpack.c.l.b16 %v1550
        %v1592 = vunpack.c.l.b16 %v1551
        %v1593 = vunpack.c.l.b16 %v1552
        %v1594 = vunpack.c.l.b16 %v1553
        %v1595 = vunpack.c.l.b16 %v1554
        %v1596 = vunpack.c.l.b16 %v1555
        %v1597 = vunpack.c.l.b16 %v1556
        %v1598 = vunpack.c.l.b16 %v1557
        %v1599 = vunpack.c.l.b16 %v1558
        %v1600 = vunpack.c.l.b16 %v1559
        %v1601 = vunpack.c.l.b16 %v1560
        %v1602 = vunpack.c.l.b16 %v1561
        %v1603 = vpack.c.b16 %v1588, %v1587
        %v1604 = vpack.c.b16 %v1590, %v1589
        %v1605 = vpack.c.b16 %v1592, %v1591
        %v1606 = vpack.c.b16 %v1594, %v1593
        %v1607 = vpack.c.b16 %v1596, %v1595
        %v1608 = vpack.c.b16 %v1598, %v1597
        %v1609 = vpack.c.b16 %v1600, %v1599
        %v1610 = vpack.c.b16 %v1602, %v1601
        %1619 = vmatprep.subr.bf16.mxu0 0
        %1620 = vmatpush1.bf16.msra.mxu0 %v1603
        %1621 = vmatprep.subr.bf16.mxu0 0
        %1622 = vmatpush1.bf16.msra.mxu0 %v1604
        %1623 = vmatprep.subr.bf16.mxu0 0
        %1624 = vmatpush1.bf16.msra.mxu0 %v1605
        %1625 = vmatprep.subr.bf16.mxu0 0
        %1626 = vmatpush1.bf16.msra.mxu0 %v1606
        %1627 = vmatprep.subr.bf16.mxu0 0
        %1628 = vmatpush1.bf16.msra.mxu0 %v1607
        %1629 = vmatprep.subr.bf16.mxu0 0
        %1630 = vmatpush1.bf16.msra.mxu0 %v1608
        %1631 = vmatprep.subr.bf16.mxu0 0
        %1632 = vmatpush1.bf16.msra.mxu0 %v1609
        %1633 = vmatprep.subr.bf16.mxu0 0
        %1634 = vmatpush1.bf16.msra.mxu0 %v1610
        %1635 = vmatprep.subr.bf16.mxu0 0
        %1636 = vmatpush1.bf16.msra.mxu0 0
        %1637 = vmatprep.subr.bf16.mxu0 0
        %1638 = vmatpush1.bf16.msra.mxu0 0
        %1639 = vmatprep.subr.bf16.mxu0 0
        %1640 = vmatpush1.bf16.msra.mxu0 0
        %1641 = vmatprep.subr.bf16.mxu0 0
        %1642 = vmatpush1.bf16.msra.mxu0 0
        %1643 = vmatprep.subr.bf16.mxu0 0
        %1644 = vmatpush1.bf16.msra.mxu0 0
        %1645 = vmatprep.subr.bf16.mxu0 0
        %1646 = vmatpush1.bf16.msra.mxu0 0
        %1647 = vmatprep.subr.bf16.mxu0 0
        %1648 = vmatpush1.bf16.msra.mxu0 0
        %1649 = vmatprep.subr.bf16.mxu0 0
        %1650 = vmatpush1.bf16.msra.mxu0 0
        %1651 = vmatprep.mubr.bf16.mxu0 0
        %1652 = vmatmul.mubr.bf16.gmra.mrb[0].mxu0 %v1563
        %v1653 = vpop.f32.mrb[0].mxu0
        %v1654 = vadd.f32 0.0, %v1653
        %v1655 = vpop.f32.mrb[0].mxu0
        %v1656 = vpop.f32.mrb[0].mxu0
        %v1657 = vadd.f32 0.0, %v1656
        %v1658 = vpop.f32.mrb[0].mxu0
        %1659 = vmatprep.mubr.bf16.mxu0 0
        %1660 = vmatmul.mubr.bf16.gmra.mrb[0].mxu0 %v1564
        %v1661 = vpop.f32.mrb[0].mxu0
        %v1662 = vadd.f32 0.0, %v1661
        %v1663 = vpop.f32.mrb[0].mxu0
        %v1664 = vpop.f32.mrb[0].mxu0
        %v1665 = vadd.f32 0.0, %v1664
        %v1666 = vpop.f32.mrb[0].mxu0
        %1667 = vmatprep.mubr.bf16.mxu0 0
        %1668 = vmatmul.mubr.bf16.gmra.mrb[0].mxu0 %v1565
        %v1669 = vpop.f32.mrb[0].mxu0
        %v1670 = vadd.f32 0.0, %v1669
        %v1671 = vpop.f32.mrb[0].mxu0
        %v1672 = vpop.f32.mrb[0].mxu0
        %v1673 = vadd.f32 0.0, %v1672
        %v1674 = vpop.f32.mrb[0].mxu0
        %1675 = vmatprep.mubr.bf16.mxu0 0
        %1676 = vmatmul.mubr.bf16.gmra.mrb[0].mxu0 %v1566
        %v1677 = vpop.f32.mrb[0].mxu0
        %v1678 = vadd.f32 0.0, %v1677
        %v1679 = vpop.f32.mrb[0].mxu0
        %v1680 = vpop.f32.mrb[0].mxu0
        %v1681 = vpop.f32.mrb[0].mxu0
        %1682 = vdwg.mxu0
        %v1683 = vadd.f32 %v1538, %v1654
        %v1684 = vadd.f32 %v1539, %v1657
        %v1685 = vadd.f32 %v1540, %v1662
        %v1686 = vadd.f32 %v1541, %v1665
        %v1687 = vadd.f32 %v1542, %v1670
        %v1688 = vadd.f32 %v1543, %v1673
        %v1689 = vadd.f32 %v1544, %v1678
        %v1690 = vunpack.c.l.bf16 %v231
        %v1691 = vrot.slane %v231, 4
        %v1693 = vunpack.c.l.bf16 %v1691
        %v1694 = vunpack.c.l.bf16 %v1324
        %v1695 = vmax.f32 %v1690, %v1693
        %v1696 = vmax.f32 %v1695, %v1694
        %v1697 = vmax.f32 %v1304, %v756
        %v1698 = vmax.f32 %v1305, %v757
        %v1699 = vmax.f32 %v1306, %v758
        %v1700 = vmax.f32 %v1307, %v759
        %v1701 = vmax.f32 %v1308, %v760
        %v1702 = vmax.f32 %v1309, %v761
        %v1703 = vmax.f32 %v1310, %v1696
        %v1704 = vld [vmem:[%s3] sm:$0x1]
        %v1706 = vlaneseq
        %v1707 = vshrl.u32 %v1706, 7
        %v1708 = vsub.s32 0, %v1707
        %v1709 = vrot.slane %v1704, %v1708
        %v1711 = vadd.f32 %v1683, %v1709
        %v1712 = vadd.f32 %v1684, %v1709
        %v1713 = vadd.f32 %v1685, %v1709
        %v1714 = vadd.f32 %v1686, %v1709
        %v1715 = vadd.f32 %v1687, %v1709
        %v1716 = vadd.f32 %v1688, %v1709
        %v1717 = vadd.f32 %v1689, %v1709
        %1718 = vst [vmem:[%s193] sm:$0xff] %v1711
        %1719 = vst [vmem:[%s193 + $0x10] sm:$0xff] %v1712
        %1720 = vst [vmem:[%s193 + $0x20] sm:$0xff] %v1713
        %1721 = vst [vmem:[%s193 + $0x30] sm:$0xff] %v1714
        %1722 = vst [vmem:[%s193 + $0x40] sm:$0xff] %v1715
        %1723 = vst [vmem:[%s193 + $0x50] sm:$0xff] %v1716
        %1724 = vst [vmem:[%s193 + $0x60] sm:$0xff] %v1717
        %1725 = vst [vmem:[%s193 + $0x8] sm:$0xff] %v1697
        %1726 = vst [vmem:[%s193 + $0x18] sm:$0xff] %v1698
        %1727 = vst [vmem:[%s193 + $0x28] sm:$0xff] %v1699
        %1728 = vst [vmem:[%s193 + $0x38] sm:$0xff] %v1700
        %1729 = vst [vmem:[%s193 + $0x48] sm:$0xff] %v1701
        %1730 = vst [vmem:[%s193 + $0x58] sm:$0xff] %v1702
        %1731 = vst [vmem:[%s193 + $0x68] sm:$0xff] %v1703
        %s1732 = sand.u32 %s115, 1
        %s1733 = scalar_lea.sflag [#allocation3], %s1732
        %s1734 = sand.u32 %s115, 1
        %s1735 = smul.addr %s1734, 112
        %s1736 = scalar_lea.vmem [#allocation2], %s1735
        // Predicated region
        $region37: #{tpu_custom_call.1} parent=35 // pred_check
          %p1737 = pneg %p125
        $region38: #{tpu_custom_call.1} parent=35 // pred_check_branch
          %1739 = sbr.rel (%p1737) target = $region40
        $region39: #{tpu_custom_call.1} parent=35 // pred_region
          %s1740 = smul.u32 7, %s18
          %s1742 = ssub.s32 1792, 1792
          %1743 = vsyncadd %s1733, %s1742
          %s1744 = smul.addr %s1740, 2
          %s1745 = smul.addr %s1744, 128
          %s1746 = scalar_lea.hbm %s4, %s1745
          %s1747 = sshll.u32 %s1736, 4
          %s1748 = int_to_ptr.vmem [resolvable:$true] %s1747
          %1753 = dma.vmem_to_hbm [thread:$0]  %s1748, 1792, %s1746, %s1733, 256, 256, 16
        $region40: #{tpu_custom_call.1} parent=35 // pred_fallthru
          _
      $region36: #{tpu_custom_call.1} parent=5 // pred_fallthru
        _
      %p1754 = scmp.le.s32.totalorder 2, %s13
      // Predicated region
      $region41: #{tpu_custom_call.1} parent=5 // pred_check
        %p1755 = pneg %p1754
      $region42: #{tpu_custom_call.1} parent=5 // pred_check_branch
        %1757 = sbr.rel (%p1755) target = $region44
      $region43: #{tpu_custom_call.1} parent=5 // pred_region
        %s1758 = ssub.s32 %s13, 2
        // Predicated region
        $region45: #{tpu_custom_call.1} parent=43 // pred_check
          %p1759 = pneg %p131
        $region46: #{tpu_custom_call.1} parent=43 // pred_check_branch
          %1761 = sbr.rel (%p1759) target = $region48
        $region47: #{tpu_custom_call.1} parent=43 // pred_region
          %s1762 = sand.u32 %s116, 1
          %s1763 = scalar_lea.sflag [#allocation3], %s1762
          %s1764 = sand.u32 %s116, 1
          %s1765 = smul.addr %s1764, 112
          %s1766 = scalar_lea.vmem [#allocation2], %s1765
          %1767 = dma.done %s1763, 1792
        $region48: #{tpu_custom_call.1} parent=43 // pred_fallthru
          _
      $region44: #{tpu_custom_call.1} parent=5 // pred_fallthru
        _
    $region6: #{tpu_custom_call.1} parent=1 // loop_footer
      %s17 = sadd.s32 1, %s13
    $region7: #{tpu_custom_call.1} parent=1 // loop_footer_branch
      %12 = sbr.rel target = $region3
    $region8: #{tpu_custom_call.1} parent=1 // loop_exit
      _
    %1768 = vsyncpa [#allocation3], 1
    %s1769 = scalar_lea.sflag [#allocation3], 1
    %1770 = vsyncpa %s1769, 1

</llo_original>
